<compile_context>
chip_gen: v7x
topology: tpu7x:2x2x1
jax: 0.10.0
libtpu: 0.0.40
codegen_flags: <defaults>
</compile_context>

<pallas_src>
import functools
import math

import jax
import jax.numpy as jnp
from jax.experimental import pallas as pl
from jax.experimental.pallas import tpu as pltpu


# ----------------------------------------------------------------------------
# Static model configuration (scaled-down wav2vec2; Python constants)
# ----------------------------------------------------------------------------

CONV_CFG = [  # (out_channels, kernel, stride) -- scaled-down wav2vec2 extractor
    (64, 10, 5),
    (64, 3, 2),
    (64, 2, 2),
]
ENC_DIM = 64
N_HEADS = 4
HEAD_DIM = ENC_DIM // N_HEADS
FFN_DIM = 128

T_RAW = 320                          # raw waveform length used in this script
T1 = (T_RAW - 10) // 5 + 1           # 63  (stage-1 frames)
T2 = (T1 - 3) // 2 + 1               # 31  (stage-2 frames)
T3 = (T2 - 2) // 2 + 1               # 15  (stage-3 frames = encoder T')
NP1 = 16                             # rows per stage-1 phase group (T1 = 4*16 - 1)
PATCH_W = 16                         # stage-1 patch width padded 10 -> 16 lanes

# slab64: all matmul weights with 64 output columns, row-packed, bf16.
# Every segment starts at a multiple of 16 rows (aligned bf16 sublane slices).
R_W1 = 0        # conv1 weight (10,64), rows 10..15 zero-padded
R_W2_0 = 16     # conv2 weight tap k=0 (64,64)
R_W2_1 = 80     # conv2 tap k=1
R_W2_2 = 144    # conv2 tap k=2
R_W3_0 = 208    # conv3 tap k=0
R_W3_1 = 272    # conv3 tap k=1
R_PROJ = 336    # post_extract_proj (64,64)
R_WO = 400      # attention output projection (64,64)
R_FW2 = 464     # FFN second matmul (128,64)
SLAB64_ROWS = 592

# slabw: wide weights, column-packed, bf16.  (64, 384)
C_QKV = 0       # packed Wqkv (64, 192)
C_FW1 = 256     # FFN first matmul (64, 128), 128-lane-aligned start
SLABW_COLS = 384

# vec slab: every LN gamma/beta and bias as one f32 (16, 192) block.
(V_B1, V_B2, V_B3, V_LN0G, V_LN0B, V_PROJB, V_ELNG, V_ELNB,
 V_BQKV, V_BO, V_LN1G, V_LN1B, V_FB1, V_FB2, V_LN2G, V_LN2B) = range(16)
VEC_ROWS = 16
VEC_COLS = 192


def _gelu(x):
    # tanh-approximate GELU (EUP-friendly).
    # TODO(synk): fairseq wav2vec2 uses erf-GELU; outputs differ slightly.
    c = math.sqrt(2.0 / math.pi)
    return 0.5 * x * (1.0 + jnp.tanh(c * (x + 0.044715 * x * x * x)))


# ----------------------------------------------------------------------------
# Fully fused kernel: conv extractor -> feature LN -> proj -> encoder LN ->
# MHSA -> residual+LN1 -> FFN -> residual+LN2.  One batch element per step.
# ----------------------------------------------------------------------------

def _ssl_kernel(p_ref, w64_ref, ww_ref, vec_ref, o_ref,
                *, n_heads, head_dim, scale, eps=1e-5):
    bf16 = jnp.bfloat16
    f32 = jnp.float32
    D = ENC_DIM

    def vec(row, width=D):                       # (1, width) f32 row of vec slab
        return vec_ref[row:row + 1, 0:width]

    def w64(row, rows=D):                        # (rows, 64) bf16 slab segment
        return w64_ref[row:row + rows, :]

    def mm(a, b):                                # bf16 matmul, f32 accumulation
        return jnp.dot(a.astype(bf16), b.astype(bf16), preferred_element_type=f32)

    def ln(h, grow, brow):                       # f32 layernorm over last dim
        mu = jnp.mean(h, axis=-1, keepdims=True)
        d = h - mu                               # CSE'd centered term
        var = jnp.mean(d * d, axis=-1, keepdims=True)
        return d * jax.lax.rsqrt(var + eps) * vec(grow) + vec(brow)

    # ---- conv stage 1 (Cin=1, k=10, s=5): one (64,16)@(16,64) matmul over the
    # phase-major patch matrix (row 16*p + r = window starting at 5*(4r+p)).
    patches = p_ref[0]                                               # (64, 16) f32
    h1 = _gelu(mm(patches, w64(R_W1, 16)) + vec(V_B1))               # (64, 64)
    # Phase groups of the stage-1 output: p_k[r] = h1_time[4r + k].
    p0, p1, p2 = h1[0:16], h1[16:32], h1[32:48]
    p3 = h1[48:63]                         # 15 valid rows; row 63 is padding

    # ---- conv stage 2 (k=3, s=2): outputs computed directly in even/odd
    # time-phases so stage 3 only needs contiguous slices.
    w2_0, w2_1, w2_2 = w64(R_W2_0), w64(R_W2_1), w64(R_W2_2)
    b2 = vec(V_B2)
    h2e = _gelu(mm(p0, w2_0) + mm(p1, w2_1) + mm(p2, w2_2) + b2)          # t = 2r
    h2o = _gelu(mm(p2[0:15], w2_0) + mm(p3, w2_1) + mm(h1[1:16], w2_2) + b2)  # t = 2r+1

    # ---- conv stage 3 (k=2, s=2) -> (T3, D) frame features
    feats = _gelu(mm(h2e[0:15], w64(R_W3_0)) + mm(h2o, w64(R_W3_1)) + vec(V_B3))

    # ---- feature layer norm + post_extract_proj
    # TODO(synk): group norm on the first conv block and the convolutional
    # positional embedding of wav2vec2 are omitted (no checkpoint available).
    h = ln(feats, V_LN0G, V_LN0B)
    h = mm(h, w64(R_PROJ)) + vec(V_PROJB)

    # ---- encoder layer norm (self-attention input)
    x2 = ln(h, V_ELNG, V_ELNB)

    # ---- multi-head self-attention: one packed QKV matmul, one packed Wo.
    qkv = mm(x2, ww_ref[:, C_QKV:C_QKV + 3 * D]) + vec(V_BQKV, 3 * D)    # (T3, 192)
    heads = []
    for hh in range(n_heads):
        lo = hh * head_dim
        q = qkv[:, lo:lo + head_dim]
        k = qkv[:, D + lo:D + lo + head_dim]
        v = qkv[:, 2 * D + lo:2 * D + lo + head_dim]
        s = jax.lax.dot_general(q.astype(bf16), k.astype(bf16),
                                (((1,), (1,)), ((), ())),
                                preferred_element_type=f32) * scale
        m = jnp.max(s, axis=-1, keepdims=True)
        p = jnp.exp(s - m)
        p = p * pl.reciprocal(jnp.sum(p, axis=-1, keepdims=True), approx=True)
        heads.append(mm(p, v))                                           # (T3, dh)
    attn = mm(jnp.concatenate(heads, axis=-1), w64(R_WO)) + vec(V_BO)

    # ---- residual + LN1
    x3 = ln(x2 + attn, V_LN1G, V_LN1B)

    # ---- FFN (GELU) + residual + LN2
    f = mm(x3, ww_ref[:, C_FW1:C_FW1 + FFN_DIM]) + vec(V_FB1, FFN_DIM)
    f = _gelu(f)
    f = mm(f, w64(R_FW2, FFN_DIM)) + vec(V_FB2)
    o_ref[0] = ln(x3 + f, V_LN2G, V_LN2B)


def fused_forward(params, patches):
    B = patches.shape[0]
    kern = functools.partial(_ssl_kernel, n_heads=N_HEADS, head_dim=HEAD_DIM,
                             scale=1.0 / math.sqrt(HEAD_DIM))
    return pl.pallas_call(
        kern,
        out_shape=jax.ShapeDtypeStruct((B, T3, ENC_DIM), jnp.float32),
        grid=(B,),
        in_specs=[
            pl.BlockSpec((1, 4 * NP1, PATCH_W), lambda b: (b, 0, 0)),   # patches
            pl.BlockSpec((SLAB64_ROWS, ENC_DIM), lambda b: (0, 0)),     # bf16 slab
            pl.BlockSpec((ENC_DIM, SLABW_COLS), lambda b: (0, 0)),      # bf16 wide slab
            pl.BlockSpec((VEC_ROWS, VEC_COLS), lambda b: (0, 0)),       # f32 vec slab
        ],
        out_specs=pl.BlockSpec((1, T3, ENC_DIM), lambda b: (b, 0, 0)),
        compiler_params=pltpu.CompilerParams(dimension_semantics=("parallel",)),
    )(patches, params["w64"], params["ww"], params["vec"])


# ----------------------------------------------------------------------------
# Wrapper-side input prep: phase-major stage-1 im2col via reshapes/slices only
# ----------------------------------------------------------------------------

def build_patches(x):
    """x: (B, T_RAW) f32 -> (B, 64, 16) phase-major stage-1 patches.

    Row 16*p + r holds the 10-sample window starting at 5*(4r + p), zero
    padded to 16 lanes.  Pure reshapes / static slices -- no gather.
    """
    B = x.shape[0]
    xr = x.reshape(B, NP1, 20)                  # row r = samples [20r, 20r+20)
    p0 = xr[:, :, 0:10]                         # windows at 20r
    p1 = xr[:, :, 5:15]                         # windows at 20r + 5
    p2 = xr[:, :, 10:20]                        # windows at 20r + 10
    p3 = x[:, 15:15 + 20 * (NP1 - 1)].reshape(B, NP1 - 1, 20)[:, :, 0:10]
    p3 = jnp.concatenate([p3, jnp.zeros((B, 1, 10), x.dtype)], axis=1)
    patches = jnp.concatenate([p0, p1, p2, p3], axis=1)        # (B, 64, 10)
    return jnp.pad(patches, ((0, 0), (0, 0), (0, PATCH_W - 10)))


# ----------------------------------------------------------------------------
# Synthetic wav2vec2-style parameters, packed into DMA-friendly slabs
# ----------------------------------------------------------------------------

def init_params(key):
    def nrm(k, shape, scale=0.02):
        return scale * jax.random.normal(k, shape, dtype=jnp.float32)

    keys = iter(jax.random.split(key, 16))
    D, F = ENC_DIM, FFN_DIM

    w1 = nrm(next(keys), (10, D))               # conv1 (k*Cin, Cout), Cin=1
    w2 = nrm(next(keys), (3 * D, D))            # conv2 (k*Cin, Cout)
    w3 = nrm(next(keys), (2 * D, D))            # conv3 (k*Cin, Cout)
    proj_w = nrm(next(keys), (D, D))            # post_extract_proj
    wqkv = nrm(next(keys), (D, 3 * D))          # packed q|k|v projection
    wo = nrm(next(keys), (D, D))                # attention output projection
    ffn_w1 = nrm(next(keys), (D, F))
    ffn_w2 = nrm(next(keys), (F, D))

    slab64 = jnp.zeros((SLAB64_ROWS, D), jnp.float32)
    slab64 = slab64.at[R_W1:R_W1 + 10].set(w1)
    slab64 = slab64.at[R_W2_0:R_W2_0 + D].set(w2[0:D])
    slab64 = slab64.at[R_W2_1:R_W2_1 + D].set(w2[D:2 * D])
    slab64 = slab64.at[R_W2_2:R_W2_2 + D].set(w2[2 * D:3 * D])
    slab64 = slab64.at[R_W3_0:R_W3_0 + D].set(w3[0:D])
    slab64 = slab64.at[R_W3_1:R_W3_1 + D].set(w3[D:2 * D])
    slab64 = slab64.at[R_PROJ:R_PROJ + D].set(proj_w)
    slab64 = slab64.at[R_WO:R_WO + D].set(wo)
    slab64 = slab64.at[R_FW2:R_FW2 + F].set(ffn_w2)

    slabw = jnp.zeros((D, SLABW_COLS), jnp.float32)
    slabw = slabw.at[:, C_QKV:C_QKV + 3 * D].set(wqkv)
    slabw = slabw.at[:, C_FW1:C_FW1 + F].set(ffn_w1)

    vec = jnp.zeros((VEC_ROWS, VEC_COLS), jnp.float32)
    ones64 = jnp.ones((D,), jnp.float32)
    for row in (V_LN0G, V_ELNG, V_LN1G, V_LN2G):
        vec = vec.at[row, 0:D].set(ones64)
    # all biases / LN betas stay zero (no checkpoint to load from)

    return {"w64": slab64.astype(jnp.bfloat16),
            "ww": slabw.astype(jnp.bfloat16),
            "vec": vec}


# ----------------------------------------------------------------------------
# Forward pass (mirrors SSLModel.forward / extract_feat)
# ----------------------------------------------------------------------------

def ssl_forward(params, input_data):
    # input_tmp = input_data[:, :, 0] if input_data.ndim == 3 else input_data
    x = input_data[:, :, 0] if input_data.ndim == 3 else input_data
    x = x.astype(jnp.float32)
    patches = build_patches(x)                  # reshapes/slices only, no gather
    return fused_forward(params, patches)       # emb = model(...)['x']


if __name__ == "__main__":
    key = jax.random.PRNGKey(0)
    k_param, k_input = jax.random.split(key)

    params = init_params(k_param)

    # Raw waveform, (B, T, 1) to exercise the input_data[:, :, 0] path.
    B = 2
    input_data = jax.random.normal(k_input, (B, T_RAW, 1), dtype=jnp.float32)

    emb = jax.jit(ssl_forward)(params, input_data)
    emb = jax.block_until_ready(emb)

    assert emb.shape == (B, T3, ENC_DIM), emb.shape
    assert jnp.all(jnp.isfinite(emb))
    print("KERNEL_OK")
</pallas_src>

<mosaic_0001>
module attributes {stable_mosaic.version = 11 : i64} {
  func.func @_ssl_kernel(%arg0: i32, %arg1: memref<1x64x16xf32, #tpu.memory_space<vmem>>, %arg2: memref<592x64xbf16, #tpu.memory_space<vmem>>, %arg3: memref<64x384xbf16, #tpu.memory_space<vmem>>, %arg4: memref<16x192xf32, #tpu.memory_space<vmem>>, %arg5: memref<1x15x64xf32, #tpu.memory_space<vmem>>) attributes {dimension_semantics = [#tpu.dimension_semantics<parallel>], iteration_bounds = array<i64: 2>, scalar_prefetch = 0 : i64, scratch_operands = 0 : i64, tpu.core_type = #tpu.core_type<tc>, window_params = [{transform_indices = @transform_0, window_bounds = array<i64: 1, 64, 16>}, {pipeline_mode = #tpu.pipeline_mode<synchronous>, transform_indices = @transform_1, window_bounds = array<i64: 592, 64>}, {pipeline_mode = #tpu.pipeline_mode<synchronous>, transform_indices = @transform_2, window_bounds = array<i64: 64, 384>}, {pipeline_mode = #tpu.pipeline_mode<synchronous>, transform_indices = @transform_3, window_bounds = array<i64: 16, 192>}, {transform_indices = @transform_4, window_bounds = array<i64: 1, 15, 64>}]} {
    %c0 = arith.constant 0 : index
    %c0_0 = arith.constant 0 : index
    %c0_1 = arith.constant 0 : index
    %0 = vector.load %arg1[%c0, %c0_0, %c0_1] : memref<1x64x16xf32, #tpu.memory_space<vmem>>, vector<1x64x16xf32>
    %1 = vector.shape_cast %0 : vector<1x64x16xf32> to vector<64x16xf32>
    %c0_2 = arith.constant 0 : index
    %c0_3 = arith.constant 0 : index
    %2 = vector.load %arg2[%c0_2, %c0_3] : memref<592x64xbf16, #tpu.memory_space<vmem>>, vector<16x64xbf16>
    %3 = arith.truncf %1 : vector<64x16xf32> to vector<64x16xbf16>
    %cst = arith.constant dense<0.000000e+00> : vector<64x64xf32>
    %4 = tpu.matmul %3, %2, %cst {dimension_numbers = #tpu.dot_dimension_numbers<[1], [0], [0], [1], [0, 0, 1, 1], [], []>} : vector<64x16xbf16>, vector<16x64xbf16>, vector<64x64xf32> -> vector<64x64xf32>
    %c0_4 = arith.constant 0 : index
    %c0_5 = arith.constant 0 : index
    %5 = vector.load %arg4[%c0_4, %c0_5] : memref<16x192xf32, #tpu.memory_space<vmem>>, vector<1x64xf32>
    %6 = vector.broadcast %5 : vector<1x64xf32> to vector<64x64xf32>
    %7 = arith.addf %4, %6 : vector<64x64xf32>
    %cst_6 = arith.constant 5.000000e-01 : f32
    %8 = vector.broadcast %cst_6 : f32 to vector<64x64xf32>
    %9 = arith.mulf %8, %7 : vector<64x64xf32>
    %cst_7 = arith.constant 4.471500e-02 : f32
    %10 = vector.broadcast %cst_7 : f32 to vector<64x64xf32>
    %11 = arith.mulf %10, %7 : vector<64x64xf32>
    %12 = arith.mulf %11, %7 : vector<64x64xf32>
    %13 = arith.mulf %12, %7 : vector<64x64xf32>
    %14 = arith.addf %7, %13 : vector<64x64xf32>
    %cst_8 = arith.constant 0.797884583 : f32
    %15 = vector.broadcast %cst_8 : f32 to vector<64x64xf32>
    %16 = arith.mulf %15, %14 : vector<64x64xf32>
    %17 = math.tanh %16 : vector<64x64xf32>
    %cst_9 = arith.constant 1.000000e+00 : f32
    %18 = vector.broadcast %cst_9 : f32 to vector<64x64xf32>
    %19 = arith.addf %18, %17 : vector<64x64xf32>
    %20 = arith.mulf %9, %19 : vector<64x64xf32>
    %21 = vector.extract_strided_slice %20 {offsets = [0, 0], sizes = [16, 64], strides = [1, 1]} : vector<64x64xf32> to vector<16x64xf32>
    %22 = vector.extract_strided_slice %20 {offsets = [16, 0], sizes = [16, 64], strides = [1, 1]} : vector<64x64xf32> to vector<16x64xf32>
    %23 = vector.extract_strided_slice %20 {offsets = [32, 0], sizes = [16, 64], strides = [1, 1]} : vector<64x64xf32> to vector<16x64xf32>
    %24 = vector.extract_strided_slice %20 {offsets = [48, 0], sizes = [15, 64], strides = [1, 1]} : vector<64x64xf32> to vector<15x64xf32>
    %c16 = arith.constant 16 : index
    %c0_10 = arith.constant 0 : index
    %25 = vector.load %arg2[%c16, %c0_10] : memref<592x64xbf16, #tpu.memory_space<vmem>>, vector<64x64xbf16>
    %c80 = arith.constant 80 : index
    %c0_11 = arith.constant 0 : index
    %26 = vector.load %arg2[%c80, %c0_11] : memref<592x64xbf16, #tpu.memory_space<vmem>>, vector<64x64xbf16>
    %c144 = arith.constant 144 : index
    %c0_12 = arith.constant 0 : index
    %27 = vector.load %arg2[%c144, %c0_12] : memref<592x64xbf16, #tpu.memory_space<vmem>>, vector<64x64xbf16>
    %c1 = arith.constant 1 : index
    %c0_13 = arith.constant 0 : index
    %28 = vector.load %arg4[%c1, %c0_13] : memref<16x192xf32, #tpu.memory_space<vmem>>, vector<1x64xf32>
    %29 = arith.truncf %21 : vector<16x64xf32> to vector<16x64xbf16>
    %cst_14 = arith.constant dense<0.000000e+00> : vector<16x64xf32>
    %30 = tpu.matmul %29, %25, %cst_14 {dimension_numbers = #tpu.dot_dimension_numbers<[1], [0], [0], [1], [0, 0, 1, 1], [], []>} : vector<16x64xbf16>, vector<64x64xbf16>, vector<16x64xf32> -> vector<16x64xf32>
    %31 = arith.truncf %22 : vector<16x64xf32> to vector<16x64xbf16>
    %cst_15 = arith.constant dense<0.000000e+00> : vector<16x64xf32>
    %32 = tpu.matmul %31, %26, %cst_15 {dimension_numbers = #tpu.dot_dimension_numbers<[1], [0], [0], [1], [0, 0, 1, 1], [], []>} : vector<16x64xbf16>, vector<64x64xbf16>, vector<16x64xf32> -> vector<16x64xf32>
    %33 = arith.addf %30, %32 : vector<16x64xf32>
    %34 = arith.truncf %23 : vector<16x64xf32> to vector<16x64xbf16>
    %cst_16 = arith.constant dense<0.000000e+00> : vector<16x64xf32>
    %35 = tpu.matmul %34, %27, %cst_16 {dimension_numbers = #tpu.dot_dimension_numbers<[1], [0], [0], [1], [0, 0, 1, 1], [], []>} : vector<16x64xbf16>, vector<64x64xbf16>, vector<16x64xf32> -> vector<16x64xf32>
    %36 = arith.addf %33, %35 : vector<16x64xf32>
    %37 = vector.broadcast %28 : vector<1x64xf32> to vector<16x64xf32>
    %38 = arith.addf %36, %37 : vector<16x64xf32>
    %cst_17 = arith.constant 5.000000e-01 : f32
    %39 = vector.broadcast %cst_17 : f32 to vector<16x64xf32>
    %40 = arith.mulf %39, %38 : vector<16x64xf32>
    %cst_18 = arith.constant 4.471500e-02 : f32
    %41 = vector.broadcast %cst_18 : f32 to vector<16x64xf32>
    %42 = arith.mulf %41, %38 : vector<16x64xf32>
    %43 = arith.mulf %42, %38 : vector<16x64xf32>
    %44 = arith.mulf %43, %38 : vector<16x64xf32>
    %45 = arith.addf %38, %44 : vector<16x64xf32>
    %cst_19 = arith.constant 0.797884583 : f32
    %46 = vector.broadcast %cst_19 : f32 to vector<16x64xf32>
    %47 = arith.mulf %46, %45 : vector<16x64xf32>
    %48 = math.tanh %47 : vector<16x64xf32>
    %cst_20 = arith.constant 1.000000e+00 : f32
    %49 = vector.broadcast %cst_20 : f32 to vector<16x64xf32>
    %50 = arith.addf %49, %48 : vector<16x64xf32>
    %51 = arith.mulf %40, %50 : vector<16x64xf32>
    %52 = vector.extract_strided_slice %23 {offsets = [0, 0], sizes = [15, 64], strides = [1, 1]} : vector<16x64xf32> to vector<15x64xf32>
    %53 = arith.truncf %52 : vector<15x64xf32> to vector<15x64xbf16>
    %cst_21 = arith.constant dense<0.000000e+00> : vector<15x64xf32>
    %54 = tpu.matmul %53, %25, %cst_21 {dimension_numbers = #tpu.dot_dimension_numbers<[1], [0], [0], [1], [0, 0, 1, 1], [], []>} : vector<15x64xbf16>, vector<64x64xbf16>, vector<15x64xf32> -> vector<15x64xf32>
    %55 = arith.truncf %24 : vector<15x64xf32> to vector<15x64xbf16>
    %cst_22 = arith.constant dense<0.000000e+00> : vector<15x64xf32>
    %56 = tpu.matmul %55, %26, %cst_22 {dimension_numbers = #tpu.dot_dimension_numbers<[1], [0], [0], [1], [0, 0, 1, 1], [], []>} : vector<15x64xbf16>, vector<64x64xbf16>, vector<15x64xf32> -> vector<15x64xf32>
    %57 = arith.addf %54, %56 : vector<15x64xf32>
    %58 = vector.extract_strided_slice %20 {offsets = [1, 0], sizes = [15, 64], strides = [1, 1]} : vector<64x64xf32> to vector<15x64xf32>
    %59 = arith.truncf %58 : vector<15x64xf32> to vector<15x64xbf16>
    %cst_23 = arith.constant dense<0.000000e+00> : vector<15x64xf32>
    %60 = tpu.matmul %59, %27, %cst_23 {dimension_numbers = #tpu.dot_dimension_numbers<[1], [0], [0], [1], [0, 0, 1, 1], [], []>} : vector<15x64xbf16>, vector<64x64xbf16>, vector<15x64xf32> -> vector<15x64xf32>
    %61 = arith.addf %57, %60 : vector<15x64xf32>
    %62 = vector.broadcast %28 : vector<1x64xf32> to vector<15x64xf32>
    %63 = arith.addf %61, %62 : vector<15x64xf32>
    %cst_24 = arith.constant 5.000000e-01 : f32
    %64 = vector.broadcast %cst_24 : f32 to vector<15x64xf32>
    %65 = arith.mulf %64, %63 : vector<15x64xf32>
    %cst_25 = arith.constant 4.471500e-02 : f32
    %66 = vector.broadcast %cst_25 : f32 to vector<15x64xf32>
    %67 = arith.mulf %66, %63 : vector<15x64xf32>
    %68 = arith.mulf %67, %63 : vector<15x64xf32>
    %69 = arith.mulf %68, %63 : vector<15x64xf32>
    %70 = arith.addf %63, %69 : vector<15x64xf32>
    %cst_26 = arith.constant 0.797884583 : f32
    %71 = vector.broadcast %cst_26 : f32 to vector<15x64xf32>
    %72 = arith.mulf %71, %70 : vector<15x64xf32>
    %73 = math.tanh %72 : vector<15x64xf32>
    %cst_27 = arith.constant 1.000000e+00 : f32
    %74 = vector.broadcast %cst_27 : f32 to vector<15x64xf32>
    %75 = arith.addf %74, %73 : vector<15x64xf32>
    %76 = arith.mulf %65, %75 : vector<15x64xf32>
    %77 = vector.extract_strided_slice %51 {offsets = [0, 0], sizes = [15, 64], strides = [1, 1]} : vector<16x64xf32> to vector<15x64xf32>
    %c208 = arith.constant 208 : index
    %c0_28 = arith.constant 0 : index
    %78 = vector.load %arg2[%c208, %c0_28] : memref<592x64xbf16, #tpu.memory_space<vmem>>, vector<64x64xbf16>
    %79 = arith.truncf %77 : vector<15x64xf32> to vector<15x64xbf16>
    %cst_29 = arith.constant dense<0.000000e+00> : vector<15x64xf32>
    %80 = tpu.matmul %79, %78, %cst_29 {dimension_numbers = #tpu.dot_dimension_numbers<[1], [0], [0], [1], [0, 0, 1, 1], [], []>} : vector<15x64xbf16>, vector<64x64xbf16>, vector<15x64xf32> -> vector<15x64xf32>
    %c272 = arith.constant 272 : index
    %c0_30 = arith.constant 0 : index
    %81 = vector.load %arg2[%c272, %c0_30] : memref<592x64xbf16, #tpu.memory_space<vmem>>, vector<64x64xbf16>
    %82 = arith.truncf %76 : vector<15x64xf32> to vector<15x64xbf16>
    %cst_31 = arith.constant dense<0.000000e+00> : vector<15x64xf32>
    %83 = tpu.matmul %82, %81, %cst_31 {dimension_numbers = #tpu.dot_dimension_numbers<[1], [0], [0], [1], [0, 0, 1, 1], [], []>} : vector<15x64xbf16>, vector<64x64xbf16>, vector<15x64xf32> -> vector<15x64xf32>
    %84 = arith.addf %80, %83 : vector<15x64xf32>
    %c2 = arith.constant 2 : index
    %c0_32 = arith.constant 0 : index
    %85 = vector.load %arg4[%c2, %c0_32] : memref<16x192xf32, #tpu.memory_space<vmem>>, vector<1x64xf32>
    %86 = vector.broadcast %85 : vector<1x64xf32> to vector<15x64xf32>
    %87 = arith.addf %84, %86 : vector<15x64xf32>
    %cst_33 = arith.constant 5.000000e-01 : f32
    %88 = vector.broadcast %cst_33 : f32 to vector<15x64xf32>
    %89 = arith.mulf %88, %87 : vector<15x64xf32>
    %cst_34 = arith.constant 4.471500e-02 : f32
    %90 = vector.broadcast %cst_34 : f32 to vector<15x64xf32>
    %91 = arith.mulf %90, %87 : vector<15x64xf32>
    %92 = arith.mulf %91, %87 : vector<15x64xf32>
    %93 = arith.mulf %92, %87 : vector<15x64xf32>
    %94 = arith.addf %87, %93 : vector<15x64xf32>
    %cst_35 = arith.constant 0.797884583 : f32
    %95 = vector.broadcast %cst_35 : f32 to vector<15x64xf32>
    %96 = arith.mulf %95, %94 : vector<15x64xf32>
    %97 = math.tanh %96 : vector<15x64xf32>
    %cst_36 = arith.constant 1.000000e+00 : f32
    %98 = vector.broadcast %cst_36 : f32 to vector<15x64xf32>
    %99 = arith.addf %98, %97 : vector<15x64xf32>
    %100 = arith.mulf %89, %99 : vector<15x64xf32>
    %cst_37 = arith.constant dense<0.000000e+00> : vector<15xf32>
    %101 = vector.multi_reduction <add>, %100, %cst_37 [1] : vector<15x64xf32> to vector<15xf32>
    %102 = vector.shape_cast %101 : vector<15xf32> to vector<15x1xf32>
    %cst_38 = arith.constant 6.400000e+01 : f32
    %103 = vector.broadcast %cst_38 : f32 to vector<15x1xf32>
    %104 = arith.divf %102, %103 : vector<15x1xf32>
    %105 = vector.broadcast %104 : vector<15x1xf32> to vector<15x64xf32>
    %106 = arith.subf %100, %105 : vector<15x64xf32>
    %107 = arith.mulf %106, %106 : vector<15x64xf32>
    %cst_39 = arith.constant dense<0.000000e+00> : vector<15xf32>
    %108 = vector.multi_reduction <add>, %107, %cst_39 [1] : vector<15x64xf32> to vector<15xf32>
    %109 = vector.shape_cast %108 : vector<15xf32> to vector<15x1xf32>
    %cst_40 = arith.constant 6.400000e+01 : f32
    %110 = vector.broadcast %cst_40 : f32 to vector<15x1xf32>
    %111 = arith.divf %109, %110 : vector<15x1xf32>
    %cst_41 = arith.constant 9.99999974E-6 : f32
    %112 = vector.broadcast %cst_41 : f32 to vector<15x1xf32>
    %113 = arith.addf %111, %112 : vector<15x1xf32>
    %114 = math.rsqrt %113 : vector<15x1xf32>
    %115 = vector.broadcast %114 : vector<15x1xf32> to vector<15x64xf32>
    %116 = arith.mulf %106, %115 : vector<15x64xf32>
    %c3 = arith.constant 3 : index
    %c0_42 = arith.constant 0 : index
    %117 = vector.load %arg4[%c3, %c0_42] : memref<16x192xf32, #tpu.memory_space<vmem>>, vector<1x64xf32>
    %118 = vector.broadcast %117 : vector<1x64xf32> to vector<15x64xf32>
    %119 = arith.mulf %116, %118 : vector<15x64xf32>
    %c4 = arith.constant 4 : index
    %c0_43 = arith.constant 0 : index
    %120 = vector.load %arg4[%c4, %c0_43] : memref<16x192xf32, #tpu.memory_space<vmem>>, vector<1x64xf32>
    %121 = vector.broadcast %120 : vector<1x64xf32> to vector<15x64xf32>
    %122 = arith.addf %119, %121 : vector<15x64xf32>
    %c336 = arith.constant 336 : index
    %c0_44 = arith.constant 0 : index
    %123 = vector.load %arg2[%c336, %c0_44] : memref<592x64xbf16, #tpu.memory_space<vmem>>, vector<64x64xbf16>
    %124 = arith.truncf %122 : vector<15x64xf32> to vector<15x64xbf16>
    %cst_45 = arith.constant dense<0.000000e+00> : vector<15x64xf32>
    %125 = tpu.matmul %124, %123, %cst_45 {dimension_numbers = #tpu.dot_dimension_numbers<[1], [0], [0], [1], [0, 0, 1, 1], [], []>} : vector<15x64xbf16>, vector<64x64xbf16>, vector<15x64xf32> -> vector<15x64xf32>
    %c5 = arith.constant 5 : index
    %c0_46 = arith.constant 0 : index
    %126 = vector.load %arg4[%c5, %c0_46] : memref<16x192xf32, #tpu.memory_space<vmem>>, vector<1x64xf32>
    %127 = vector.broadcast %126 : vector<1x64xf32> to vector<15x64xf32>
    %128 = arith.addf %125, %127 : vector<15x64xf32>
    %cst_47 = arith.constant dense<0.000000e+00> : vector<15xf32>
    %129 = vector.multi_reduction <add>, %128, %cst_47 [1] : vector<15x64xf32> to vector<15xf32>
    %130 = vector.shape_cast %129 : vector<15xf32> to vector<15x1xf32>
    %cst_48 = arith.constant 6.400000e+01 : f32
    %131 = vector.broadcast %cst_48 : f32 to vector<15x1xf32>
    %132 = arith.divf %130, %131 : vector<15x1xf32>
    %133 = vector.broadcast %132 : vector<15x1xf32> to vector<15x64xf32>
    %134 = arith.subf %128, %133 : vector<15x64xf32>
    %135 = arith.mulf %134, %134 : vector<15x64xf32>
    %cst_49 = arith.constant dense<0.000000e+00> : vector<15xf32>
    %136 = vector.multi_reduction <add>, %135, %cst_49 [1] : vector<15x64xf32> to vector<15xf32>
    %137 = vector.shape_cast %136 : vector<15xf32> to vector<15x1xf32>
    %cst_50 = arith.constant 6.400000e+01 : f32
    %138 = vector.broadcast %cst_50 : f32 to vector<15x1xf32>
    %139 = arith.divf %137, %138 : vector<15x1xf32>
    %cst_51 = arith.constant 9.99999974E-6 : f32
    %140 = vector.broadcast %cst_51 : f32 to vector<15x1xf32>
    %141 = arith.addf %139, %140 : vector<15x1xf32>
    %142 = math.rsqrt %141 : vector<15x1xf32>
    %143 = vector.broadcast %142 : vector<15x1xf32> to vector<15x64xf32>
    %144 = arith.mulf %134, %143 : vector<15x64xf32>
    %c6 = arith.constant 6 : index
    %c0_52 = arith.constant 0 : index
    %145 = vector.load %arg4[%c6, %c0_52] : memref<16x192xf32, #tpu.memory_space<vmem>>, vector<1x64xf32>
    %146 = vector.broadcast %145 : vector<1x64xf32> to vector<15x64xf32>
    %147 = arith.mulf %144, %146 : vector<15x64xf32>
    %c7 = arith.constant 7 : index
    %c0_53 = arith.constant 0 : index
    %148 = vector.load %arg4[%c7, %c0_53] : memref<16x192xf32, #tpu.memory_space<vmem>>, vector<1x64xf32>
    %149 = vector.broadcast %148 : vector<1x64xf32> to vector<15x64xf32>
    %150 = arith.addf %147, %149 : vector<15x64xf32>
    %c0_54 = arith.constant 0 : index
    %c0_55 = arith.constant 0 : index
    %151 = vector.load %arg3[%c0_54, %c0_55] : memref<64x384xbf16, #tpu.memory_space<vmem>>, vector<64x192xbf16>
    %152 = arith.truncf %150 : vector<15x64xf32> to vector<15x64xbf16>
    %cst_56 = arith.constant dense<0.000000e+00> : vector<15x192xf32>
    %153 = tpu.matmul %152, %151, %cst_56 {dimension_numbers = #tpu.dot_dimension_numbers<[1], [0], [0], [1], [0, 0, 1, 1], [], []>} : vector<15x64xbf16>, vector<64x192xbf16>, vector<15x192xf32> -> vector<15x192xf32>
    %c8 = arith.constant 8 : index
    %c0_57 = arith.constant 0 : index
    %154 = vector.load %arg4[%c8, %c0_57] : memref<16x192xf32, #tpu.memory_space<vmem>>, vector<1x192xf32>
    %155 = vector.broadcast %154 : vector<1x192xf32> to vector<15x192xf32>
    %156 = arith.addf %153, %155 : vector<15x192xf32>
    %157 = vector.extract_strided_slice %156 {offsets = [0, 0], sizes = [15, 16], strides = [1, 1]} : vector<15x192xf32> to vector<15x16xf32>
    %158 = vector.extract_strided_slice %156 {offsets = [0, 64], sizes = [15, 16], strides = [1, 1]} : vector<15x192xf32> to vector<15x16xf32>
    %159 = vector.extract_strided_slice %156 {offsets = [0, 128], sizes = [15, 16], strides = [1, 1]} : vector<15x192xf32> to vector<15x16xf32>
    %160 = arith.truncf %157 : vector<15x16xf32> to vector<15x16xbf16>
    %161 = arith.truncf %158 : vector<15x16xf32> to vector<15x16xbf16>
    %cst_58 = arith.constant dense<0.000000e+00> : vector<15x15xf32>
    %162 = tpu.matmul %160, %161, %cst_58 {dimension_numbers = #tpu.dot_dimension_numbers<[1], [1], [0], [0], [0, 0, 1, 0], [], []>} : vector<15x16xbf16>, vector<15x16xbf16>, vector<15x15xf32> -> vector<15x15xf32>
    %cst_59 = arith.constant 2.500000e-01 : f32
    %163 = vector.broadcast %cst_59 : f32 to vector<15x15xf32>
    %164 = arith.mulf %162, %163 : vector<15x15xf32>
    %cst_60 = arith.constant dense<0xFF800000> : vector<15xf32>
    %165 = vector.multi_reduction <maximumf>, %164, %cst_60 [1] : vector<15x15xf32> to vector<15xf32>
    %166 = vector.shape_cast %165 : vector<15xf32> to vector<15x1xf32>
    %167 = vector.broadcast %166 : vector<15x1xf32> to vector<15x15xf32>
    %168 = arith.subf %164, %167 : vector<15x15xf32>
    %169 = math.exp %168 : vector<15x15xf32>
    %cst_61 = arith.constant dense<0.000000e+00> : vector<15xf32>
    %170 = vector.multi_reduction <add>, %169, %cst_61 [1] : vector<15x15xf32> to vector<15xf32>
    %171 = vector.shape_cast %170 : vector<15xf32> to vector<15x1xf32>
    %172 = tpu.reciprocal %171 {approx = true} : vector<15x1xf32> -> vector<15x1xf32>
    %173 = vector.broadcast %172 : vector<15x1xf32> to vector<15x15xf32>
    %174 = arith.mulf %169, %173 : vector<15x15xf32>
    %175 = arith.truncf %174 : vector<15x15xf32> to vector<15x15xbf16>
    %176 = arith.truncf %159 : vector<15x16xf32> to vector<15x16xbf16>
    %cst_62 = arith.constant dense<0.000000e+00> : vector<15x16xf32>
    %177 = tpu.matmul %175, %176, %cst_62 {dimension_numbers = #tpu.dot_dimension_numbers<[1], [0], [0], [1], [0, 0, 1, 1], [], []>} : vector<15x15xbf16>, vector<15x16xbf16>, vector<15x16xf32> -> vector<15x16xf32>
    %178 = vector.extract_strided_slice %156 {offsets = [0, 16], sizes = [15, 16], strides = [1, 1]} : vector<15x192xf32> to vector<15x16xf32>
    %179 = vector.extract_strided_slice %156 {offsets = [0, 80], sizes = [15, 16], strides = [1, 1]} : vector<15x192xf32> to vector<15x16xf32>
    %180 = vector.extract_strided_slice %156 {offsets = [0, 144], sizes = [15, 16], strides = [1, 1]} : vector<15x192xf32> to vector<15x16xf32>
    %181 = arith.truncf %178 : vector<15x16xf32> to vector<15x16xbf16>
    %182 = arith.truncf %179 : vector<15x16xf32> to vector<15x16xbf16>
    %cst_63 = arith.constant dense<0.000000e+00> : vector<15x15xf32>
    %183 = tpu.matmul %181, %182, %cst_63 {dimension_numbers = #tpu.dot_dimension_numbers<[1], [1], [0], [0], [0, 0, 1, 0], [], []>} : vector<15x16xbf16>, vector<15x16xbf16>, vector<15x15xf32> -> vector<15x15xf32>
    %cst_64 = arith.constant 2.500000e-01 : f32
    %184 = vector.broadcast %cst_64 : f32 to vector<15x15xf32>
    %185 = arith.mulf %183, %184 : vector<15x15xf32>
    %cst_65 = arith.constant dense<0xFF800000> : vector<15xf32>
    %186 = vector.multi_reduction <maximumf>, %185, %cst_65 [1] : vector<15x15xf32> to vector<15xf32>
    %187 = vector.shape_cast %186 : vector<15xf32> to vector<15x1xf32>
    %188 = vector.broadcast %187 : vector<15x1xf32> to vector<15x15xf32>
    %189 = arith.subf %185, %188 : vector<15x15xf32>
    %190 = math.exp %189 : vector<15x15xf32>
    %cst_66 = arith.constant dense<0.000000e+00> : vector<15xf32>
    %191 = vector.multi_reduction <add>, %190, %cst_66 [1] : vector<15x15xf32> to vector<15xf32>
    %192 = vector.shape_cast %191 : vector<15xf32> to vector<15x1xf32>
    %193 = tpu.reciprocal %192 {approx = true} : vector<15x1xf32> -> vector<15x1xf32>
    %194 = vector.broadcast %193 : vector<15x1xf32> to vector<15x15xf32>
    %195 = arith.mulf %190, %194 : vector<15x15xf32>
    %196 = arith.truncf %195 : vector<15x15xf32> to vector<15x15xbf16>
    %197 = arith.truncf %180 : vector<15x16xf32> to vector<15x16xbf16>
    %cst_67 = arith.constant dense<0.000000e+00> : vector<15x16xf32>
    %198 = tpu.matmul %196, %197, %cst_67 {dimension_numbers = #tpu.dot_dimension_numbers<[1], [0], [0], [1], [0, 0, 1, 1], [], []>} : vector<15x15xbf16>, vector<15x16xbf16>, vector<15x16xf32> -> vector<15x16xf32>
    %199 = vector.extract_strided_slice %156 {offsets = [0, 32], sizes = [15, 16], strides = [1, 1]} : vector<15x192xf32> to vector<15x16xf32>
    %200 = vector.extract_strided_slice %156 {offsets = [0, 96], sizes = [15, 16], strides = [1, 1]} : vector<15x192xf32> to vector<15x16xf32>
    %201 = vector.extract_strided_slice %156 {offsets = [0, 160], sizes = [15, 16], strides = [1, 1]} : vector<15x192xf32> to vector<15x16xf32>
    %202 = arith.truncf %199 : vector<15x16xf32> to vector<15x16xbf16>
    %203 = arith.truncf %200 : vector<15x16xf32> to vector<15x16xbf16>
    %cst_68 = arith.constant dense<0.000000e+00> : vector<15x15xf32>
    %204 = tpu.matmul %202, %203, %cst_68 {dimension_numbers = #tpu.dot_dimension_numbers<[1], [1], [0], [0], [0, 0, 1, 0], [], []>} : vector<15x16xbf16>, vector<15x16xbf16>, vector<15x15xf32> -> vector<15x15xf32>
    %cst_69 = arith.constant 2.500000e-01 : f32
    %205 = vector.broadcast %cst_69 : f32 to vector<15x15xf32>
    %206 = arith.mulf %204, %205 : vector<15x15xf32>
    %cst_70 = arith.constant dense<0xFF800000> : vector<15xf32>
    %207 = vector.multi_reduction <maximumf>, %206, %cst_70 [1] : vector<15x15xf32> to vector<15xf32>
    %208 = vector.shape_cast %207 : vector<15xf32> to vector<15x1xf32>
    %209 = vector.broadcast %208 : vector<15x1xf32> to vector<15x15xf32>
    %210 = arith.subf %206, %209 : vector<15x15xf32>
    %211 = math.exp %210 : vector<15x15xf32>
    %cst_71 = arith.constant dense<0.000000e+00> : vector<15xf32>
    %212 = vector.multi_reduction <add>, %211, %cst_71 [1] : vector<15x15xf32> to vector<15xf32>
    %213 = vector.shape_cast %212 : vector<15xf32> to vector<15x1xf32>
    %214 = tpu.reciprocal %213 {approx = true} : vector<15x1xf32> -> vector<15x1xf32>
    %215 = vector.broadcast %214 : vector<15x1xf32> to vector<15x15xf32>
    %216 = arith.mulf %211, %215 : vector<15x15xf32>
    %217 = arith.truncf %216 : vector<15x15xf32> to vector<15x15xbf16>
    %218 = arith.truncf %201 : vector<15x16xf32> to vector<15x16xbf16>
    %cst_72 = arith.constant dense<0.000000e+00> : vector<15x16xf32>
    %219 = tpu.matmul %217, %218, %cst_72 {dimension_numbers = #tpu.dot_dimension_numbers<[1], [0], [0], [1], [0, 0, 1, 1], [], []>} : vector<15x15xbf16>, vector<15x16xbf16>, vector<15x16xf32> -> vector<15x16xf32>
    %220 = vector.extract_strided_slice %156 {offsets = [0, 48], sizes = [15, 16], strides = [1, 1]} : vector<15x192xf32> to vector<15x16xf32>
    %221 = vector.extract_strided_slice %156 {offsets = [0, 112], sizes = [15, 16], strides = [1, 1]} : vector<15x192xf32> to vector<15x16xf32>
    %222 = vector.extract_strided_slice %156 {offsets = [0, 176], sizes = [15, 16], strides = [1, 1]} : vector<15x192xf32> to vector<15x16xf32>
    %223 = arith.truncf %220 : vector<15x16xf32> to vector<15x16xbf16>
    %224 = arith.truncf %221 : vector<15x16xf32> to vector<15x16xbf16>
    %cst_73 = arith.constant dense<0.000000e+00> : vector<15x15xf32>
    %225 = tpu.matmul %223, %224, %cst_73 {dimension_numbers = #tpu.dot_dimension_numbers<[1], [1], [0], [0], [0, 0, 1, 0], [], []>} : vector<15x16xbf16>, vector<15x16xbf16>, vector<15x15xf32> -> vector<15x15xf32>
    %cst_74 = arith.constant 2.500000e-01 : f32
    %226 = vector.broadcast %cst_74 : f32 to vector<15x15xf32>
    %227 = arith.mulf %225, %226 : vector<15x15xf32>
    %cst_75 = arith.constant dense<0xFF800000> : vector<15xf32>
    %228 = vector.multi_reduction <maximumf>, %227, %cst_75 [1] : vector<15x15xf32> to vector<15xf32>
    %229 = vector.shape_cast %228 : vector<15xf32> to vector<15x1xf32>
    %230 = vector.broadcast %229 : vector<15x1xf32> to vector<15x15xf32>
    %231 = arith.subf %227, %230 : vector<15x15xf32>
    %232 = math.exp %231 : vector<15x15xf32>
    %cst_76 = arith.constant dense<0.000000e+00> : vector<15xf32>
    %233 = vector.multi_reduction <add>, %232, %cst_76 [1] : vector<15x15xf32> to vector<15xf32>
    %234 = vector.shape_cast %233 : vector<15xf32> to vector<15x1xf32>
    %235 = tpu.reciprocal %234 {approx = true} : vector<15x1xf32> -> vector<15x1xf32>
    %236 = vector.broadcast %235 : vector<15x1xf32> to vector<15x15xf32>
    %237 = arith.mulf %232, %236 : vector<15x15xf32>
    %238 = arith.truncf %237 : vector<15x15xf32> to vector<15x15xbf16>
    %239 = arith.truncf %222 : vector<15x16xf32> to vector<15x16xbf16>
    %cst_77 = arith.constant dense<0.000000e+00> : vector<15x16xf32>
    %240 = tpu.matmul %238, %239, %cst_77 {dimension_numbers = #tpu.dot_dimension_numbers<[1], [0], [0], [1], [0, 0, 1, 1], [], []>} : vector<15x15xbf16>, vector<15x16xbf16>, vector<15x16xf32> -> vector<15x16xf32>
    %241 = tpu.concatenate %177, %198, %219, %240 in 1 : vector<15x16xf32>, vector<15x16xf32>, vector<15x16xf32>, vector<15x16xf32> -> vector<15x64xf32>
    %c400 = arith.constant 400 : index
    %c0_78 = arith.constant 0 : index
    %242 = vector.load %arg2[%c400, %c0_78] : memref<592x64xbf16, #tpu.memory_space<vmem>>, vector<64x64xbf16>
    %243 = arith.truncf %241 : vector<15x64xf32> to vector<15x64xbf16>
    %cst_79 = arith.constant dense<0.000000e+00> : vector<15x64xf32>
    %244 = tpu.matmul %243, %242, %cst_79 {dimension_numbers = #tpu.dot_dimension_numbers<[1], [0], [0], [1], [0, 0, 1, 1], [], []>} : vector<15x64xbf16>, vector<64x64xbf16>, vector<15x64xf32> -> vector<15x64xf32>
    %c9 = arith.constant 9 : index
    %c0_80 = arith.constant 0 : index
    %245 = vector.load %arg4[%c9, %c0_80] : memref<16x192xf32, #tpu.memory_space<vmem>>, vector<1x64xf32>
    %246 = vector.broadcast %245 : vector<1x64xf32> to vector<15x64xf32>
    %247 = arith.addf %244, %246 : vector<15x64xf32>
    %248 = arith.addf %150, %247 : vector<15x64xf32>
    %cst_81 = arith.constant dense<0.000000e+00> : vector<15xf32>
    %249 = vector.multi_reduction <add>, %248, %cst_81 [1] : vector<15x64xf32> to vector<15xf32>
    %250 = vector.shape_cast %249 : vector<15xf32> to vector<15x1xf32>
    %cst_82 = arith.constant 6.400000e+01 : f32
    %251 = vector.broadcast %cst_82 : f32 to vector<15x1xf32>
    %252 = arith.divf %250, %251 : vector<15x1xf32>
    %253 = vector.broadcast %252 : vector<15x1xf32> to vector<15x64xf32>
    %254 = arith.subf %248, %253 : vector<15x64xf32>
    %255 = arith.mulf %254, %254 : vector<15x64xf32>
    %cst_83 = arith.constant dense<0.000000e+00> : vector<15xf32>
    %256 = vector.multi_reduction <add>, %255, %cst_83 [1] : vector<15x64xf32> to vector<15xf32>
    %257 = vector.shape_cast %256 : vector<15xf32> to vector<15x1xf32>
    %cst_84 = arith.constant 6.400000e+01 : f32
    %258 = vector.broadcast %cst_84 : f32 to vector<15x1xf32>
    %259 = arith.divf %257, %258 : vector<15x1xf32>
    %cst_85 = arith.constant 9.99999974E-6 : f32
    %260 = vector.broadcast %cst_85 : f32 to vector<15x1xf32>
    %261 = arith.addf %259, %260 : vector<15x1xf32>
    %262 = math.rsqrt %261 : vector<15x1xf32>
    %263 = vector.broadcast %262 : vector<15x1xf32> to vector<15x64xf32>
    %264 = arith.mulf %254, %263 : vector<15x64xf32>
    %c10 = arith.constant 10 : index
    %c0_86 = arith.constant 0 : index
    %265 = vector.load %arg4[%c10, %c0_86] : memref<16x192xf32, #tpu.memory_space<vmem>>, vector<1x64xf32>
    %266 = vector.broadcast %265 : vector<1x64xf32> to vector<15x64xf32>
    %267 = arith.mulf %264, %266 : vector<15x64xf32>
    %c11 = arith.constant 11 : index
    %c0_87 = arith.constant 0 : index
    %268 = vector.load %arg4[%c11, %c0_87] : memref<16x192xf32, #tpu.memory_space<vmem>>, vector<1x64xf32>
    %269 = vector.broadcast %268 : vector<1x64xf32> to vector<15x64xf32>
    %270 = arith.addf %267, %269 : vector<15x64xf32>
    %c0_88 = arith.constant 0 : index
    %c256 = arith.constant 256 : index
    %271 = vector.load %arg3[%c0_88, %c256] : memref<64x384xbf16, #tpu.memory_space<vmem>>, vector<64x128xbf16>
    %272 = arith.truncf %270 : vector<15x64xf32> to vector<15x64xbf16>
    %cst_89 = arith.constant dense<0.000000e+00> : vector<15x128xf32>
    %273 = tpu.matmul %272, %271, %cst_89 {dimension_numbers = #tpu.dot_dimension_numbers<[1], [0], [0], [1], [0, 0, 1, 1], [], []>} : vector<15x64xbf16>, vector<64x128xbf16>, vector<15x128xf32> -> vector<15x128xf32>
    %c12 = arith.constant 12 : index
    %c0_90 = arith.constant 0 : index
    %274 = vector.load %arg4[%c12, %c0_90] : memref<16x192xf32, #tpu.memory_space<vmem>>, vector<1x128xf32>
    %275 = vector.broadcast %274 : vector<1x128xf32> to vector<15x128xf32>
    %276 = arith.addf %273, %275 : vector<15x128xf32>
    %cst_91 = arith.constant 5.000000e-01 : f32
    %277 = vector.broadcast %cst_91 : f32 to vector<15x128xf32>
    %278 = arith.mulf %277, %276 : vector<15x128xf32>
    %cst_92 = arith.constant 4.471500e-02 : f32
    %279 = vector.broadcast %cst_92 : f32 to vector<15x128xf32>
    %280 = arith.mulf %279, %276 : vector<15x128xf32>
    %281 = arith.mulf %280, %276 : vector<15x128xf32>
    %282 = arith.mulf %281, %276 : vector<15x128xf32>
    %283 = arith.addf %276, %282 : vector<15x128xf32>
    %cst_93 = arith.constant 0.797884583 : f32
    %284 = vector.broadcast %cst_93 : f32 to vector<15x128xf32>
    %285 = arith.mulf %284, %283 : vector<15x128xf32>
    %286 = math.tanh %285 : vector<15x128xf32>
    %cst_94 = arith.constant 1.000000e+00 : f32
    %287 = vector.broadcast %cst_94 : f32 to vector<15x128xf32>
    %288 = arith.addf %287, %286 : vector<15x128xf32>
    %289 = arith.mulf %278, %288 : vector<15x128xf32>
    %c464 = arith.constant 464 : index
    %c0_95 = arith.constant 0 : index
    %290 = vector.load %arg2[%c464, %c0_95] : memref<592x64xbf16, #tpu.memory_space<vmem>>, vector<128x64xbf16>
    %291 = arith.truncf %289 : vector<15x128xf32> to vector<15x128xbf16>
    %cst_96 = arith.constant dense<0.000000e+00> : vector<15x64xf32>
    %292 = tpu.matmul %291, %290, %cst_96 {dimension_numbers = #tpu.dot_dimension_numbers<[1], [0], [0], [1], [0, 0, 1, 1], [], []>} : vector<15x128xbf16>, vector<128x64xbf16>, vector<15x64xf32> -> vector<15x64xf32>
    %c13 = arith.constant 13 : index
    %c0_97 = arith.constant 0 : index
    %293 = vector.load %arg4[%c13, %c0_97] : memref<16x192xf32, #tpu.memory_space<vmem>>, vector<1x64xf32>
    %294 = vector.broadcast %293 : vector<1x64xf32> to vector<15x64xf32>
    %295 = arith.addf %292, %294 : vector<15x64xf32>
    %296 = arith.addf %270, %295 : vector<15x64xf32>
    %cst_98 = arith.constant dense<0.000000e+00> : vector<15xf32>
    %297 = vector.multi_reduction <add>, %296, %cst_98 [1] : vector<15x64xf32> to vector<15xf32>
    %298 = vector.shape_cast %297 : vector<15xf32> to vector<15x1xf32>
    %cst_99 = arith.constant 6.400000e+01 : f32
    %299 = vector.broadcast %cst_99 : f32 to vector<15x1xf32>
    %300 = arith.divf %298, %299 : vector<15x1xf32>
    %301 = vector.broadcast %300 : vector<15x1xf32> to vector<15x64xf32>
    %302 = arith.subf %296, %301 : vector<15x64xf32>
    %303 = arith.mulf %302, %302 : vector<15x64xf32>
    %cst_100 = arith.constant dense<0.000000e+00> : vector<15xf32>
    %304 = vector.multi_reduction <add>, %303, %cst_100 [1] : vector<15x64xf32> to vector<15xf32>
    %305 = vector.shape_cast %304 : vector<15xf32> to vector<15x1xf32>
    %cst_101 = arith.constant 6.400000e+01 : f32
    %306 = vector.broadcast %cst_101 : f32 to vector<15x1xf32>
    %307 = arith.divf %305, %306 : vector<15x1xf32>
    %cst_102 = arith.constant 9.99999974E-6 : f32
    %308 = vector.broadcast %cst_102 : f32 to vector<15x1xf32>
    %309 = arith.addf %307, %308 : vector<15x1xf32>
    %310 = math.rsqrt %309 : vector<15x1xf32>
    %311 = vector.broadcast %310 : vector<15x1xf32> to vector<15x64xf32>
    %312 = arith.mulf %302, %311 : vector<15x64xf32>
    %c14 = arith.constant 14 : index
    %c0_103 = arith.constant 0 : index
    %313 = vector.load %arg4[%c14, %c0_103] : memref<16x192xf32, #tpu.memory_space<vmem>>, vector<1x64xf32>
    %314 = vector.broadcast %313 : vector<1x64xf32> to vector<15x64xf32>
    %315 = arith.mulf %312, %314 : vector<15x64xf32>
    %c15 = arith.constant 15 : index
    %c0_104 = arith.constant 0 : index
    %316 = vector.load %arg4[%c15, %c0_104] : memref<16x192xf32, #tpu.memory_space<vmem>>, vector<1x64xf32>
    %317 = vector.broadcast %316 : vector<1x64xf32> to vector<15x64xf32>
    %318 = arith.addf %315, %317 : vector<15x64xf32>
    %c0_105 = arith.constant 0 : index
    %c0_106 = arith.constant 0 : index
    %c0_107 = arith.constant 0 : index
    %319 = vector.load %arg5[%c0_105, %c0_106, %c0_107] : memref<1x15x64xf32, #tpu.memory_space<vmem>>, vector<1x15x64xf32>
    %320 = vector.shape_cast %319 : vector<1x15x64xf32> to vector<15x64xf32>
    %321 = vector.shape_cast %318 : vector<15x64xf32> to vector<1x15x64xf32>
    tpu.vector_store %arg5[%c0_105, %c0_106, %c0_107], %321 {strides = array<i32>} : memref<1x15x64xf32, #tpu.memory_space<vmem>>, vector<1x15x64xf32>,
    return
  }
  func.func @transform_0(%arg0: i32) -> (i32, i32, i32) {
    %c0_i32 = arith.constant 0 : i32
    %c0_i32_0 = arith.constant 0 : i32
    %c0_i32_1 = arith.constant 0 : i32
    return %arg0, %c0_i32, %c0_i32_0 : i32, i32, i32
  }
  func.func @transform_1(%arg0: i32) -> (i32, i32) {
    %c0_i32 = arith.constant 0 : i32
    %c0_i32_0 = arith.constant 0 : i32
    %c0_i32_1 = arith.constant 0 : i32
    return %c0_i32, %c0_i32_0 : i32, i32
  }
  func.func @transform_2(%arg0: i32) -> (i32, i32) {
    %c0_i32 = arith.constant 0 : i32
    %c0_i32_0 = arith.constant 0 : i32
    %c0_i32_1 = arith.constant 0 : i32
    return %c0_i32, %c0_i32_0 : i32, i32
  }
  func.func @transform_3(%arg0: i32) -> (i32, i32) {
    %c0_i32 = arith.constant 0 : i32
    %c0_i32_0 = arith.constant 0 : i32
    %c0_i32_1 = arith.constant 0 : i32
    return %c0_i32, %c0_i32_0 : i32, i32
  }
  func.func @transform_4(%arg0: i32) -> (i32, i32, i32) {
    %c0_i32 = arith.constant 0 : i32
    %c0_i32_0 = arith.constant 0 : i32
    %c0_i32_1 = arith.constant 0 : i32
    return %arg0, %c0_i32, %c0_i32_0 : i32, i32, i32
  }
}

</mosaic_0001>

<llo_original>
// kernel: squeeze.3
$region0: #{squeeze.3}
  %s0 = inlined_call_operand.vmem [shape: f32[2,320], index: 0, kind: input, shape index: {}]
  %s1 = inlined_call_operand.vmem [shape: f32[2,16,20], index: 1, kind: output, shape index: {}]
  $region1: #{squeeze.3} parent=0
    #allocation0 [shape = 'u8[12288]{0}', space=vmem, size = 0x3000, scoped, tag = 'scoped mem for input reshape']
    %s3 = sshllo.u32 0, 2
    %s4 = smul.addr 2, 2
    %s5 = scalar_lea.vmem %s0, %s4
    %v6 = vld [vmem:[%s5] sm:%s3]
    %s7 = scalar_lea.vmem [#allocation0], 16
    %8 = vst [vmem:[%s7] sm:%s3] %v6
    %s9 = scalar_lea.vmem %s0, 2
    %v10 = vld [vmem:[%s9] sm:%s3]
    %s11 = scalar_lea.vmem [#allocation0], 8
    %12 = vst [vmem:[%s11] sm:%s3] %v10
    %v13 = vld [vmem:[%s0] sm:%s3]
    %14 = vst [vmem:[#allocation0] sm:%s3] %v13
    %v15 = vld [vmem:[#allocation0] sm:$0x3]
    %vm16 = vcmask 162816
    %17 = vst.msk [vmem:[%s1] ss:$16 sm:$0x3] %vm16, %v15
    %s18 = scalar_lea.vmem [#allocation0], 16
    %v19 = vld [vmem:[%s18] sm:$0x3]
    %20 = vrot.lane.b32.xlu0 %v19, 124
    %v21 = vpop.permute.xlu0 %20
    %vm22 = vcmask 162816
    %s23 = scalar_lea.vmem %s1, 13
    %24 = vst.msk [vmem:[%s23] ss:$16 sm:$0x3] %vm22, %v21
    %s25 = scalar_lea.vmem [#allocation0], 8
    %v26 = vld [vmem:[%s25] sm:$0x3]
    %27 = vrot.lane.b32.xlu0 %v26, 116
    %v28 = vpop.permute.xlu0 %27
    %vm29 = vcmask 162816
    %s30 = scalar_lea.vmem %s1, 7
    %31 = vst.msk [vmem:[%s30] ss:$16 sm:$0x3] %vm29, %v28
    %v32 = vld [vmem:[#allocation0] sm:$0x3]
    %33 = vrot.lane.b32.xlu0 %v32, 108
    %v34 = vpop.permute.xlu0 %33
    %vm35 = vcmask 162816
    %s36 = scalar_lea.vmem %s1, 1
    %37 = vst.msk [vmem:[%s36] ss:$16 sm:$0x3] %vm35, %v34
    %s38 = scalar_lea.vmem [#allocation0], 16
    %v39 = vld [vmem:[%s38] sm:$0x3]
    %40 = vrot.lane.b32.xlu0 %v39, 104
    %v41 = vpop.permute.xlu0 %40
    %vm42 = vcmask 162816
    %s43 = scalar_lea.vmem %s1, 14
    %44 = vst.msk [vmem:[%s43] ss:$16 sm:$0x3] %vm42, %v41
    %s45 = scalar_lea.vmem [#allocation0], 8
    %v46 = vld [vmem:[%s45] sm:$0x3]
    %47 = vrot.lane.b32.xlu0 %v46, 96
    %v48 = vpop.permute.xlu0 %47
    %vm49 = vcmask 162816
    %s50 = scalar_lea.vmem %s1, 8
    %51 = vst.msk [vmem:[%s50] ss:$16 sm:$0x3] %vm49, %v48
    %v52 = vld [vmem:[#allocation0] sm:$0x3]
    %53 = vrot.lane.b32.xlu0 %v52, 88
    %v54 = vpop.permute.xlu0 %53
    %vm55 = vcmask 162816
    %s56 = scalar_lea.vmem %s1, 2
    %57 = vst.msk [vmem:[%s56] ss:$16 sm:$0x3] %vm55, %v54
    %s58 = scalar_lea.vmem [#allocation0], 16
    %v59 = vld [vmem:[%s58] sm:$0x3]
    %60 = vrot.lane.b32.xlu0 %v59, 84
    %v61 = vpop.permute.xlu0 %60
    %vm62 = vcmask 162816
    %s63 = scalar_lea.vmem %s1, 15
    %64 = vst.msk [vmem:[%s63] ss:$16 sm:$0x3] %vm62, %v61
    %s65 = scalar_lea.vmem [#allocation0], 8
    %v66 = vld [vmem:[%s65] sm:$0x3]
    %67 = vrot.lane.b32.xlu0 %v66, 76
    %v68 = vpop.permute.xlu0 %67
    %vm69 = vcmask 162816
    %s70 = scalar_lea.vmem %s1, 9
    %71 = vst.msk [vmem:[%s70] ss:$16 sm:$0x3] %vm69, %v68
    %v72 = vld [vmem:[#allocation0] sm:$0x3]
    %73 = vrot.lane.b32.xlu0 %v72, 68
    %v74 = vpop.permute.xlu0 %73
    %vm75 = vcmask 162816
    %s76 = scalar_lea.vmem %s1, 3
    %77 = vst.msk [vmem:[%s76] ss:$16 sm:$0x3] %vm75, %v74
    %s78 = scalar_lea.vmem [#allocation0], 8
    %v79 = vld [vmem:[%s78] sm:$0x3]
    %80 = vrot.lane.b32.xlu0 %v79, 56
    %v81 = vpop.permute.xlu0 %80
    %vm82 = vcmask 162816
    %s83 = scalar_lea.vmem %s1, 10
    %84 = vst.msk [vmem:[%s83] ss:$16 sm:$0x3] %vm82, %v81
    %v85 = vld [vmem:[#allocation0] sm:$0x3]
    %86 = vrot.lane.b32.xlu0 %v85, 48
    %v87 = vpop.permute.xlu0 %86
    %vm88 = vcmask 162816
    %s89 = scalar_lea.vmem %s1, 4
    %90 = vst.msk [vmem:[%s89] ss:$16 sm:$0x3] %vm88, %v87
    %s91 = scalar_lea.vmem [#allocation0], 8
    %v92 = vld [vmem:[%s91] sm:$0x3]
    %93 = vrot.lane.b32.xlu0 %v92, 36
    %v94 = vpop.permute.xlu0 %93
    %vm95 = vcmask 162816
    %s96 = scalar_lea.vmem %s1, 11
    %97 = vst.msk [vmem:[%s96] ss:$16 sm:$0x3] %vm95, %v94
    %v98 = vld [vmem:[#allocation0] sm:$0x3]
    %99 = vrot.lane.b32.xlu0 %v98, 28
    %v100 = vpop.permute.xlu0 %99
    %vm101 = vcmask 162816
    %s102 = scalar_lea.vmem %s1, 5
    %103 = vst.msk [vmem:[%s102] ss:$16 sm:$0x3] %vm101, %v100
    %s104 = scalar_lea.vmem [#allocation0], 8
    %v105 = vld [vmem:[%s104] sm:$0x3]
    %s106 = scalar_lea.vmem [#allocation0], 16
    %v107 = vld [vmem:[%s106] sm:$0x3]
    %vm108 = vcmask 916480
    %v109 = vsel %vm108, %v107, %v105
    %110 = vrot.lane.b32.xlu0 %v109, 16
    %v111 = vpop.permute.xlu0 %110
    %vm112 = vcmask 130048
    %s113 = scalar_lea.vmem %s1, 12
    %114 = vst.msk [vmem:[%s113] ss:$16 sm:$0x3] %vm112, %v111
    %vm115 = vcmask 162944
    %s116 = scalar_lea.vmem %s1, 12
    %117 = vst.msk [vmem:[%s116] ss:$16 sm:$0x3] %vm115, %v111
    %v118 = vld [vmem:[#allocation0] sm:$0x3]
    %s119 = scalar_lea.vmem [#allocation0], 8
    %v120 = vld [vmem:[%s119] sm:$0x3]
    %vm121 = vcmask 982016
    %v122 = vsel %vm121, %v120, %v118
    %123 = vrot.lane.b32.xlu0 %v122, 8
    %v124 = vpop.permute.xlu0 %123
    %vm125 = vcmask 64512
    %s126 = scalar_lea.vmem %s1, 6
    %127 = vst.msk [vmem:[%s126] ss:$16 sm:$0x3] %vm125, %v124
    %vm128 = vcmask 162880
    %s129 = scalar_lea.vmem %s1, 6
    %130 = vst.msk [vmem:[%s129] ss:$16 sm:$0x3] %vm128, %v124

// kernel: ssl_forward.1
$region0: #{ssl_forward.1}
  #allocation0 [shape = 'u32[]', space=smem, size = 0x4, offset = 0x4, fixed_abs, tag = 'smem constant byte address 0x4 - core index']
  #allocation1 [shape = 'u32[144,128]{1,0:T(1,128)}', space=vmem, size = 0x12000, scoped, tag = 'internal scratch']
  %s0 = inlined_call_operand.vmem [shape: f32[2,64,16], index: 0, kind: input, shape index: {}]
  %s1 = inlined_call_operand.vmem [shape: bf16[592,64], index: 1, kind: input, shape index: {}]
  %s2 = inlined_call_operand.vmem [shape: bf16[64,384], index: 2, kind: input, shape index: {}]
  %s3 = inlined_call_operand.vmem [shape: f32[16,192], index: 3, kind: input, shape index: {}]
  %s4 = inlined_call_operand.vmem [shape: f32[2,15,64], index: 4, kind: output, shape index: {}]
  %s5 = sld [smem:[#allocation0]]
  $region49: #{ssl_forward.1} parent=0
    _
  %s7 = ssub.s32 1, %s5
  %s8 = scalar_select 0, %s7, %s5
  loop: start=0, step=1, limit=4
  $region2: #{ssl_forward.1} parent=0 // loop_pre_header
    _
  $region3: #{ssl_forward.1} parent=0 // loop_header
    %s10 = sphi 0, %s14
    %p11 = scmp.ge.s32.totalorder %s10, 4
    %s20 = sphi 0, %s22
    %s23 = sphi 0, %s20
    %s24 = sphi 0, %s23
    %s40 = sphi 0, %s24
    %s44 = sphi 0, %s44
    %s46 = sphi 0, %s44
    %s47 = sphi 0, %s46
    %s61 = sphi 0, %s47
    %s65 = sphi 0, %s65
    %s67 = sphi 0, %s65
    %s68 = sphi 0, %s67
    %s82 = sphi 0, %s68
    %s86 = sphi 0, %s86
    %s88 = sphi 0, %s86
    %s89 = sphi 0, %s88
    %s103 = sphi 0, %s89
    %s109 = sphi 0, %s111
    %s112 = sphi 0, %s109
    %s113 = sphi 0, %s112
    %s129 = sphi 0, %s113
  $region4: #{ssl_forward.1} parent=0 // loop_header_branch
    %13 = sbr.rel (%p11) target = $region8
  $region5: #{ssl_forward.1} parent=0 // loop_body
    %s15 = ssub.s32 %s10, 1
    %s16 = ssub.s32 %s10, 2
    %s17 = sadd.s32 %s10, 1
    %s18 = ssub.s32 %s10, %s17
    %p19 = scmp.eq.s32.totalorder %s18, 0
    %s21 = sadd.s32 %s20, 1
    %s22 = scalar_select %p19, %s20, %s21
    %p25 = pneg %p19
    %p26 = scmp.eq.s32.totalorder %s10, 1
    %p27 = por %p25, %p26
    %p28 = scmp.ne.s32.totalorder %s20, %s23
    %p29 = scmp.eq.s32.totalorder %s10, 0
    %p30 = por %p28, %p29
    %p31 = scmp.ne.s32.totalorder %s20, %s23
    %p32 = scmp.eq.s32.totalorder %s15, 1
    %p33 = por %p31, %p32
    %p34 = scmp.ne.s32.totalorder %s23, %s24
    %p35 = scmp.eq.s32.totalorder %s15, 0
    %p36 = por %p34, %p35
    %p37 = scmp.ne.s32.totalorder %s23, %s24
    %p38 = scmp.eq.s32.totalorder %s16, 1
    %p39 = por %p37, %p38
    %p41 = scmp.ne.s32.totalorder %s24, %s40
    %p42 = scmp.eq.s32.totalorder %s16, 0
    %p43 = por %p41, %p42
    %s45 = sadd.s32 %s44, 1
    %p48 = scmp.eq.s32.totalorder %s10, 1
    %p49 = scmp.ne.s32.totalorder %s44, %s46
    %p50 = scmp.eq.s32.totalorder %s10, 0
    %p51 = por %p49, %p50
    %p52 = scmp.ne.s32.totalorder %s44, %s46
    %p53 = scmp.eq.s32.totalorder %s15, 1
    %p54 = por %p52, %p53
    %p55 = scmp.ne.s32.totalorder %s46, %s47
    %p56 = scmp.eq.s32.totalorder %s15, 0
    %p57 = por %p55, %p56
    %p58 = scmp.ne.s32.totalorder %s46, %s47
    %p59 = scmp.eq.s32.totalorder %s16, 1
    %p60 = por %p58, %p59
    %p62 = scmp.ne.s32.totalorder %s47, %s61
    %p63 = scmp.eq.s32.totalorder %s16, 0
    %p64 = por %p62, %p63
    %s66 = sadd.s32 %s65, 1
    %p69 = scmp.eq.s32.totalorder %s10, 1
    %p70 = scmp.ne.s32.totalorder %s65, %s67
    %p71 = scmp.eq.s32.totalorder %s10, 0
    %p72 = por %p70, %p71
    %p73 = scmp.ne.s32.totalorder %s65, %s67
    %p74 = scmp.eq.s32.totalorder %s15, 1
    %p75 = por %p73, %p74
    %p76 = scmp.ne.s32.totalorder %s67, %s68
    %p77 = scmp.eq.s32.totalorder %s15, 0
    %p78 = por %p76, %p77
    %p79 = scmp.ne.s32.totalorder %s67, %s68
    %p80 = scmp.eq.s32.totalorder %s16, 1
    %p81 = por %p79, %p80
    %p83 = scmp.ne.s32.totalorder %s68, %s82
    %p84 = scmp.eq.s32.totalorder %s16, 0
    %p85 = por %p83, %p84
    %s87 = sadd.s32 %s86, 1
    %p90 = scmp.eq.s32.totalorder %s10, 1
    %p91 = scmp.ne.s32.totalorder %s86, %s88
    %p92 = scmp.eq.s32.totalorder %s10, 0
    %p93 = por %p91, %p92
    %p94 = scmp.ne.s32.totalorder %s86, %s88
    %p95 = scmp.eq.s32.totalorder %s15, 1
    %p96 = por %p94, %p95
    %p97 = scmp.ne.s32.totalorder %s88, %s89
    %p98 = scmp.eq.s32.totalorder %s15, 0
    %p99 = por %p97, %p98
    %p100 = scmp.ne.s32.totalorder %s88, %s89
    %p101 = scmp.eq.s32.totalorder %s16, 1
    %p102 = por %p100, %p101
    %p104 = scmp.ne.s32.totalorder %s89, %s103
    %p105 = scmp.eq.s32.totalorder %s16, 0
    %p106 = por %p104, %p105
    %s107 = ssub.s32 %s10, %s17
    %p108 = scmp.eq.s32.totalorder %s107, 0
    %s110 = sadd.s32 %s109, 1
    %s111 = scalar_select %p108, %s109, %s110
    %p114 = pneg %p108
    %p115 = scmp.eq.s32.totalorder %s10, 1
    %p116 = por %p114, %p115
    %p117 = scmp.ne.s32.totalorder %s109, %s112
    %p118 = scmp.eq.s32.totalorder %s10, 0
    %p119 = por %p117, %p118
    %p120 = scmp.ne.s32.totalorder %s109, %s112
    %p121 = scmp.eq.s32.totalorder %s15, 1
    %p122 = por %p120, %p121
    %p123 = scmp.ne.s32.totalorder %s112, %s113
    %p124 = scmp.eq.s32.totalorder %s15, 0
    %p125 = por %p123, %p124
    %p126 = scmp.ne.s32.totalorder %s112, %s113
    %p127 = scmp.eq.s32.totalorder %s16, 1
    %p128 = por %p126, %p127
    %p130 = scmp.ne.s32.totalorder %s113, %s129
    %p131 = scmp.eq.s32.totalorder %s16, 0
    %p132 = por %p130, %p131
    %p133 = scmp.le.s32.totalorder 1, %s10
    %p134 = scmp.lt.s32.totalorder %s10, 3
    %p135 = pnand %p133, %p134
    %p136 = pneg %p135
    // Predicated region
    $region9: #{ssl_forward.1} parent=5 // pred_check
      _
    $region10: #{ssl_forward.1} parent=5 // pred_check_branch
      %138 = sbr.rel (%p135) target = $region12
    $region11: #{ssl_forward.1} parent=5 // pred_region
      %s139 = ssub.s32 %s10, 1
      // Predicated region
      $region13: #{ssl_forward.1} parent=11 // pred_check
        %p140 = pneg %p57
      $region14: #{ssl_forward.1} parent=11 // pred_check_branch
        %142 = sbr.rel (%p140) target = $region16
      $region15: #{ssl_forward.1} parent=11 // pred_region
        _
      $region16: #{ssl_forward.1} parent=11 // pred_fallthru
        _
      // Predicated region
      $region17: #{ssl_forward.1} parent=11 // pred_check
        %p143 = pneg %p78
      $region18: #{ssl_forward.1} parent=11 // pred_check_branch
        %145 = sbr.rel (%p143) target = $region20
      $region19: #{ssl_forward.1} parent=11 // pred_region
        _
      $region20: #{ssl_forward.1} parent=11 // pred_fallthru
        _
      // Predicated region
      $region21: #{ssl_forward.1} parent=11 // pred_check
        %p146 = pneg %p99
      $region22: #{ssl_forward.1} parent=11 // pred_check_branch
        %148 = sbr.rel (%p146) target = $region24
      $region23: #{ssl_forward.1} parent=11 // pred_region
        _
      $region24: #{ssl_forward.1} parent=11 // pred_fallthru
        _
    $region12: #{ssl_forward.1} parent=5 // pred_fallthru
      _
    %p149 = scmp.lt.s32.totalorder %s10, 2
    // Predicated region
    $region25: #{ssl_forward.1} parent=5 // pred_check
      %p150 = pneg %p149
    $region26: #{ssl_forward.1} parent=5 // pred_check_branch
      %152 = sbr.rel (%p150) target = $region28
    $region27: #{ssl_forward.1} parent=5 // pred_region
      // Predicated region
      $region29: #{ssl_forward.1} parent=27 // pred_check
        %p153 = pneg %p30
      $region30: #{ssl_forward.1} parent=27 // pred_check_branch
        %155 = sbr.rel (%p153) target = $region32
      $region31: #{ssl_forward.1} parent=27 // pred_region
        %p156 = scmp.lt.s32.totalorder %s10, 1
        %s157 = scalar_select %p156, %s10, 1
        %s158 = smul.addr %s157, 8
        %s159 = smul.addr %s158, 8
        %s160 = scalar_lea.vmem %s0, %s159
      $region32: #{ssl_forward.1} parent=27 // pred_fallthru
        _
    $region28: #{ssl_forward.1} parent=5 // pred_fallthru
      _
    %p161 = scmp.le.s32.totalorder 1, %s10
    %p162 = scmp.lt.s32.totalorder %s10, 3
    %p163 = pnand %p161, %p162
    %p164 = pneg %p163
    // Predicated region
    $region33: #{ssl_forward.1} parent=5 // pred_check
      _
    $region34: #{ssl_forward.1} parent=5 // pred_check_branch
      %166 = sbr.rel (%p163) target = $region36
    $region35: #{ssl_forward.1} parent=5 // pred_region
      %s167 = ssub.s32 %s10, 1
      %p168 = scmp.lt.s32.totalorder %s15, 1
      %s169 = scalar_select %p168, %s15, 1
      %s170 = smul.addr %s169, 8
      %s171 = smul.addr %s170, 8
      %s172 = scalar_lea.vmem %s0, %s171
      %p173 = pneg %p36
      %p174 = pneg %p33
      %p175 = pneg %p57
      %p176 = pneg %p54
      %p177 = pneg %p78
      %p178 = pneg %p75
      %p179 = pneg %p99
      %p180 = pneg %p96
      %p181 = pneg %p125
      %p182 = pneg %p122
      %p183 = scmp.lt.s32.totalorder %s15, 1
      %s184 = scalar_select %p183, %s15, 1
      %s185 = smul.addr %s184, 2
      %s186 = smul.addr %s185, 8
      %s187 = scalar_lea.vmem %s4, %s186
      %p188 = scmp.lt.s32.totalorder %s15, 1
      %s189 = scalar_select %p188, %s15, 1
      %s190 = smul.addr %s189, 8
      %s191 = smul.addr %s190, 8
      %s192 = scalar_lea.vmem %s0, %s191
      %p193 = scmp.lt.s32.totalorder %s15, 1
      %s194 = scalar_select %p193, %s15, 1
      %s195 = smul.addr %s194, 2
      %s196 = smul.addr %s195, 8
      %s197 = scalar_lea.vmem %s4, %s196
      %v199 = vld [vmem:[%s192] sm:$0xff]
      %v200 = vld [vmem:[%s192 + $0x8] sm:$0xff]
      %v201 = vld [vmem:[%s192 + $0x10] sm:$0xff]
      %v202 = vld [vmem:[%s192 + $0x18] sm:$0xff]
      %v203 = vld [vmem:[%s192 + $0x20] sm:$0xff]
      %v204 = vld [vmem:[%s192 + $0x28] sm:$0xff]
      %v205 = vld [vmem:[%s192 + $0x30] sm:$0xff]
      %v206 = vld [vmem:[%s192 + $0x38] sm:$0xff]
      %v207 = vld [vmem:[%s1] sm:$0xf]
      %v208 = vld [vmem:[%s1 + $0x4] sm:$0xf]
      %v209 = vpack.c.bf16 %v200, %v199
      %v210 = vpack.c.bf16 %v202, %v201
      %v211 = vpack.c.bf16 %v204, %v203
      %v212 = vpack.c.bf16 %v206, %v205
      %v213 = vld [vmem:[%s3] ss:$0 sm:$0xff]
      %v216 = vunpack.c.l.b16 %v207
      %v217 = vunpack.c.l.b16 %v208
      %v218 = vpack.c.b16 %v217, %v216
      %vm220 = vcmask 130048
      %v222 = vsel %vm220, %v209, 0
      %v225 = vsel %vm220, %v210, 0
      %v228 = vsel %vm220, %v211, 0
      %v231 = vsel %vm220, %v212, 0
      %233 = vmatprep.subr.bf16.mxu0 0
      %234 = vmatpush1.bf16.msra.mxu0 %v218
      %235 = vmatprep.subr.bf16.mxu0 0
      %236 = vmatpush1.bf16.msra.mxu0 0
      %237 = vmatprep.subr.bf16.mxu0 0
      %238 = vmatpush1.bf16.msra.mxu0 0
      %239 = vmatprep.subr.bf16.mxu0 0
      %240 = vmatpush1.bf16.msra.mxu0 0
      %241 = vmatprep.subr.bf16.mxu0 0
      %242 = vmatpush1.bf16.msra.mxu0 0
      %243 = vmatprep.subr.bf16.mxu0 0
      %244 = vmatpush1.bf16.msra.mxu0 0
      %245 = vmatprep.subr.bf16.mxu0 0
      %246 = vmatpush1.bf16.msra.mxu0 0
      %247 = vmatprep.subr.bf16.mxu0 0
      %248 = vmatpush1.bf16.msra.mxu0 0
      %249 = vmatprep.subr.bf16.mxu0 0
      %250 = vmatpush1.bf16.msra.mxu0 0
      %251 = vmatprep.subr.bf16.mxu0 0
      %252 = vmatpush1.bf16.msra.mxu0 0
      %253 = vmatprep.subr.bf16.mxu0 0
      %254 = vmatpush1.bf16.msra.mxu0 0
      %255 = vmatprep.subr.bf16.mxu0 0
      %256 = vmatpush1.bf16.msra.mxu0 0
      %257 = vmatprep.subr.bf16.mxu0 0
      %258 = vmatpush1.bf16.msra.mxu0 0
      %259 = vmatprep.subr.bf16.mxu0 0
      %260 = vmatpush1.bf16.msra.mxu0 0
      %261 = vmatprep.subr.bf16.mxu0 0
      %262 = vmatpush1.bf16.msra.mxu0 0
      %263 = vmatprep.subr.bf16.mxu0 0
      %264 = vmatpush1.bf16.msra.mxu0 0
      %265 = vmatprep.mubr.bf16.mxu0 0
      %266 = vmatmul.mubr.bf16.gmra.mrb[0].mxu0 %v222
      %v267 = vpop.f32.mrb[0].mxu0
      %v268 = vadd.f32 %v213, %v267
      %v269 = vpop.f32.mrb[0].mxu0
      %v270 = vpop.f32.mrb[0].mxu0
      %v271 = vadd.f32 %v213, %v270
      %v272 = vpop.f32.mrb[0].mxu0
      %273 = vmatprep.mubr.bf16.mxu0 0
      %274 = vmatmul.mubr.bf16.gmra.mrb[0].mxu0 %v225
      %v275 = vpop.f32.mrb[0].mxu0
      %v276 = vadd.f32 %v213, %v275
      %v277 = vpop.f32.mrb[0].mxu0
      %v278 = vpop.f32.mrb[0].mxu0
      %v279 = vadd.f32 %v213, %v278
      %v280 = vpop.f32.mrb[0].mxu0
      %281 = vmatprep.mubr.bf16.mxu0 0
      %282 = vmatmul.mubr.bf16.gmra.mrb[0].mxu0 %v228
      %v283 = vpop.f32.mrb[0].mxu0
      %v284 = vadd.f32 %v213, %v283
      %v285 = vpop.f32.mrb[0].mxu0
      %v286 = vpop.f32.mrb[0].mxu0
      %v287 = vadd.f32 %v213, %v286
      %v288 = vpop.f32.mrb[0].mxu0
      %289 = vmatprep.mubr.bf16.mxu0 0
      %290 = vmatmul.mubr.bf16.gmra.mrb[0].mxu0 %v231
      %v291 = vpop.f32.mrb[0].mxu0
      %v292 = vadd.f32 %v213, %v291
      %v293 = vpop.f32.mrb[0].mxu0
      %v294 = vpop.f32.mrb[0].mxu0
      %v295 = vadd.f32 %v213, %v294
      %v296 = vpop.f32.mrb[0].mxu0
      %297 = vdwg.mxu0
      %v298 = vmul.f32 %v268, 0.5
      %v299 = vmul.f32 %v271, 0.5
      %v300 = vmul.f32 %v276, 0.5
      %v301 = vmul.f32 %v279, 0.5
      %v302 = vmul.f32 %v284, 0.5
      %v303 = vmul.f32 %v287, 0.5
      %v304 = vmul.f32 %v292, 0.5
      %v305 = vmul.f32 %v295, 0.5
      %v306 = vmul.f32 %v268, 0.044715
      %v307 = vmul.f32 %v271, 0.044715
      %v308 = vmul.f32 %v276, 0.044715
      %v309 = vmul.f32 %v279, 0.044715
      %v310 = vmul.f32 %v284, 0.044715
      %v311 = vmul.f32 %v287, 0.044715
      %v312 = vmul.f32 %v292, 0.044715
      %v313 = vmul.f32 %v295, 0.044715
      %v314 = vmul.f32 %v306, %v268
      %v315 = vmul.f32 %v307, %v271
      %v316 = vmul.f32 %v308, %v276
      %v317 = vmul.f32 %v309, %v279
      %v318 = vmul.f32 %v310, %v284
      %v319 = vmul.f32 %v311, %v287
      %v320 = vmul.f32 %v312, %v292
      %v321 = vmul.f32 %v313, %v295
      %v322 = vmul.f32 %v314, %v268
      %v323 = vmul.f32 %v315, %v271
      %v324 = vmul.f32 %v316, %v276
      %v325 = vmul.f32 %v317, %v279
      %v326 = vmul.f32 %v318, %v284
      %v327 = vmul.f32 %v319, %v287
      %v328 = vmul.f32 %v320, %v292
      %v329 = vmul.f32 %v321, %v295
      %v330 = vadd.f32 %v268, %v322
      %v331 = vadd.f32 %v271, %v323
      %v332 = vadd.f32 %v276, %v324
      %v333 = vadd.f32 %v279, %v325
      %v334 = vadd.f32 %v284, %v326
      %v335 = vadd.f32 %v287, %v327
      %v336 = vadd.f32 %v292, %v328
      %v337 = vadd.f32 %v295, %v329
      %v338 = vmul.f32 %v330, 0.7978846
      %v339 = vmul.f32 %v331, 0.7978846
      %v340 = vmul.f32 %v332, 0.7978846
      %v341 = vmul.f32 %v333, 0.7978846
      %v342 = vmul.f32 %v334, 0.7978846
      %v343 = vmul.f32 %v335, 0.7978846
      %v344 = vmul.f32 %v336, 0.7978846
      %v345 = vmul.f32 %v337, 0.7978846
      %v346 = vtanh.pop %v338
      %v347 = vtanh.pop %v339
      %v348 = vtanh.pop %v340
      %v349 = vtanh.pop %v341
      %v350 = vtanh.pop %v342
      %v351 = vtanh.pop %v343
      %v352 = vtanh.pop %v344
      %v353 = vtanh.pop %v345
      %v354 = vadd.f32 %v346, 1.0
      %v355 = vadd.f32 %v347, 1.0
      %v356 = vadd.f32 %v348, 1.0
      %v357 = vadd.f32 %v349, 1.0
      %v358 = vadd.f32 %v350, 1.0
      %v359 = vadd.f32 %v351, 1.0
      %v360 = vadd.f32 %v352, 1.0
      %v361 = vadd.f32 %v353, 1.0
      %v362 = vmul.f32 %v298, %v354
      %v363 = vmul.f32 %v299, %v355
      %v364 = vmul.f32 %v300, %v356
      %v365 = vmul.f32 %v301, %v357
      %v366 = vmul.f32 %v302, %v358
      %v367 = vmul.f32 %v303, %v359
      %v368 = vmul.f32 %v304, %v360
      %v369 = vmul.f32 %v305, %v361
      %v370 = vld [vmem:[%s1 + $0x8] sm:$0xf]
      %v371 = vld [vmem:[%s1 + $0xc] sm:$0xf]
      %v372 = vld [vmem:[%s1 + $0x10] sm:$0xf]
      %v373 = vld [vmem:[%s1 + $0x14] sm:$0xf]
      %v374 = vld [vmem:[%s1 + $0x18] sm:$0xf]
      %v375 = vld [vmem:[%s1 + $0x1c] sm:$0xf]
      %v376 = vld [vmem:[%s1 + $0x20] sm:$0xf]
      %v377 = vld [vmem:[%s1 + $0x24] sm:$0xf]
      %v378 = vld [vmem:[%s1 + $0x28] sm:$0xf]
      %v379 = vld [vmem:[%s1 + $0x2c] sm:$0xf]
      %v380 = vld [vmem:[%s1 + $0x30] sm:$0xf]
      %v381 = vld [vmem:[%s1 + $0x34] sm:$0xf]
      %v382 = vld [vmem:[%s1 + $0x38] sm:$0xf]
      %v383 = vld [vmem:[%s1 + $0x3c] sm:$0xf]
      %v384 = vld [vmem:[%s1 + $0x40] sm:$0xf]
      %v385 = vld [vmem:[%s1 + $0x44] sm:$0xf]
      %v386 = vld [vmem:[%s1 + $0x48] sm:$0xf]
      %v387 = vld [vmem:[%s1 + $0x4c] sm:$0xf]
      %v388 = vld [vmem:[%s1 + $0x50] sm:$0xf]
      %v389 = vld [vmem:[%s1 + $0x54] sm:$0xf]
      %v390 = vld [vmem:[%s1 + $0x58] sm:$0xf]
      %v391 = vld [vmem:[%s1 + $0x5c] sm:$0xf]
      %v392 = vld [vmem:[%s1 + $0x60] sm:$0xf]
      %v393 = vld [vmem:[%s1 + $0x64] sm:$0xf]
      %v394 = vld [vmem:[%s3 + $0x1] ss:$0 sm:$0xff]
      %v395 = vpack.c.bf16 %v363, %v362
      %v396 = vpack.c.bf16 %v365, %v364
      %v405 = vunpack.c.l.b16 %v378
      %v406 = vunpack.c.l.b16 %v379
      %v407 = vunpack.c.l.b16 %v380
      %v408 = vunpack.c.l.b16 %v381
      %v409 = vunpack.c.l.b16 %v382
      %v410 = vunpack.c.l.b16 %v383
      %v411 = vunpack.c.l.b16 %v384
      %v412 = vunpack.c.l.b16 %v385
      %v413 = vpack.c.b16 %v406, %v405
      %v414 = vpack.c.b16 %v408, %v407
      %v415 = vpack.c.b16 %v410, %v409
      %v416 = vpack.c.b16 %v412, %v411
      %vm421 = vcmask 523264
      %v423 = vsel %vm421, %v396, 0
      %425 = vmatprep.subr.bf16.mxu0 0
      %426 = vmatpush1.bf16.msra.mxu0 %v413
      %427 = vmatprep.subr.bf16.mxu0 0
      %428 = vmatpush1.bf16.msra.mxu0 %v414
      %429 = vmatprep.subr.bf16.mxu0 0
      %430 = vmatpush1.bf16.msra.mxu0 %v415
      %431 = vmatprep.subr.bf16.mxu0 0
      %432 = vmatpush1.bf16.msra.mxu0 %v416
      %433 = vmatprep.subr.bf16.mxu0 0
      %434 = vmatpush1.bf16.msra.mxu0 0
      %435 = vmatprep.subr.bf16.mxu0 0
      %436 = vmatpush1.bf16.msra.mxu0 0
      %437 = vmatprep.subr.bf16.mxu0 0
      %438 = vmatpush1.bf16.msra.mxu0 0
      %439 = vmatprep.subr.bf16.mxu0 0
      %440 = vmatpush1.bf16.msra.mxu0 0
      %441 = vmatprep.subr.bf16.mxu0 0
      %442 = vmatpush1.bf16.msra.mxu0 0
      %443 = vmatprep.subr.bf16.mxu0 0
      %444 = vmatpush1.bf16.msra.mxu0 0
      %445 = vmatprep.subr.bf16.mxu0 0
      %446 = vmatpush1.bf16.msra.mxu0 0
      %447 = vmatprep.subr.bf16.mxu0 0
      %448 = vmatpush1.bf16.msra.mxu0 0
      %449 = vmatprep.subr.bf16.mxu0 0
      %450 = vmatpush1.bf16.msra.mxu0 0
      %451 = vmatprep.subr.bf16.mxu0 0
      %452 = vmatpush1.bf16.msra.mxu0 0
      %453 = vmatprep.subr.bf16.mxu0 0
      %454 = vmatpush1.bf16.msra.mxu0 0
      %455 = vmatprep.subr.bf16.mxu0 0
      %456 = vmatpush1.bf16.msra.mxu0 0
      %457 = vmatprep.mubr.bf16.mxu0 0
      %458 = vmatmul.mubr.bf16.gmra.mrb[0].mxu0 %v423
      %v459 = vpop.f32.mrb[0].mxu0
      %v460 = vadd.f32 0.0, %v459
      %v461 = vpop.f32.mrb[0].mxu0
      %v462 = vpop.f32.mrb[0].mxu0
      %v463 = vadd.f32 0.0, %v462
      %v464 = vpop.f32.mrb[0].mxu0
      %465 = vdwg.mxu0
      %v474 = vunpack.c.l.b16 %v370
      %v475 = vunpack.c.l.b16 %v371
      %v476 = vunpack.c.l.b16 %v372
      %v477 = vunpack.c.l.b16 %v373
      %v478 = vunpack.c.l.b16 %v374
      %v479 = vunpack.c.l.b16 %v375
      %v480 = vunpack.c.l.b16 %v376
      %v481 = vunpack.c.l.b16 %v377
      %v482 = vpack.c.b16 %v475, %v474
      %v483 = vpack.c.b16 %v477, %v476
      %v484 = vpack.c.b16 %v479, %v478
      %v485 = vpack.c.b16 %v481, %v480
      %v491 = vsel %vm421, %v395, 0
      %493 = vmatprep.subr.bf16.mxu0 0
      %494 = vmatpush1.bf16.msra.mxu0 %v482
      %495 = vmatprep.subr.bf16.mxu0 0
      %496 = vmatpush1.bf16.msra.mxu0 %v483
      %497 = vmatprep.subr.bf16.mxu0 0
      %498 = vmatpush1.bf16.msra.mxu0 %v484
      %499 = vmatprep.subr.bf16.mxu0 0
      %500 = vmatpush1.bf16.msra.mxu0 %v485
      %501 = vmatprep.subr.bf16.mxu0 0
      %502 = vmatpush1.bf16.msra.mxu0 0
      %503 = vmatprep.subr.bf16.mxu0 0
      %504 = vmatpush1.bf16.msra.mxu0 0
      %505 = vmatprep.subr.bf16.mxu0 0
      %506 = vmatpush1.bf16.msra.mxu0 0
      %507 = vmatprep.subr.bf16.mxu0 0
      %508 = vmatpush1.bf16.msra.mxu0 0
      %509 = vmatprep.subr.bf16.mxu0 0
      %510 = vmatpush1.bf16.msra.mxu0 0
      %511 = vmatprep.subr.bf16.mxu0 0
      %512 = vmatpush1.bf16.msra.mxu0 0
      %513 = vmatprep.subr.bf16.mxu0 0
      %514 = vmatpush1.bf16.msra.mxu0 0
      %515 = vmatprep.subr.bf16.mxu0 0
      %516 = vmatpush1.bf16.msra.mxu0 0
      %517 = vmatprep.subr.bf16.mxu0 0
      %518 = vmatpush1.bf16.msra.mxu0 0
      %519 = vmatprep.subr.bf16.mxu0 0
      %520 = vmatpush1.bf16.msra.mxu0 0
      %521 = vmatprep.subr.bf16.mxu0 0
      %522 = vmatpush1.bf16.msra.mxu0 0
      %523 = vmatprep.subr.bf16.mxu0 0
      %524 = vmatpush1.bf16.msra.mxu0 0
      %525 = vmatprep.mubr.bf16.mxu0 0
      %526 = vmatmul.mubr.bf16.gmra.mrb[0].mxu0 %v491
      %v527 = vpop.f32.mrb[0].mxu0
      %v528 = vadd.f32 %v460, %v527
      %v529 = vpop.f32.mrb[0].mxu0
      %v530 = vpop.f32.mrb[0].mxu0
      %v531 = vadd.f32 %v463, %v530
      %v532 = vpop.f32.mrb[0].mxu0
      %533 = vdwg.mxu0
      %v534 = vpack.c.bf16 %v367, %v366
      %v543 = vunpack.c.l.b16 %v386
      %v544 = vunpack.c.l.b16 %v387
      %v545 = vunpack.c.l.b16 %v388
      %v546 = vunpack.c.l.b16 %v389
      %v547 = vunpack.c.l.b16 %v390
      %v548 = vunpack.c.l.b16 %v391
      %v549 = vunpack.c.l.b16 %v392
      %v550 = vunpack.c.l.b16 %v393
      %v551 = vpack.c.b16 %v544, %v543
      %v552 = vpack.c.b16 %v546, %v545
      %v553 = vpack.c.b16 %v548, %v547
      %v554 = vpack.c.b16 %v550, %v549
      %v560 = vsel %vm421, %v534, 0
      %562 = vmatprep.subr.bf16.mxu0 0
      %563 = vmatpush1.bf16.msra.mxu0 %v551
      %564 = vmatprep.subr.bf16.mxu0 0
      %565 = vmatpush1.bf16.msra.mxu0 %v552
      %566 = vmatprep.subr.bf16.mxu0 0
      %567 = vmatpush1.bf16.msra.mxu0 %v553
      %568 = vmatprep.subr.bf16.mxu0 0
      %569 = vmatpush1.bf16.msra.mxu0 %v554
      %570 = vmatprep.subr.bf16.mxu0 0
      %571 = vmatpush1.bf16.msra.mxu0 0
      %572 = vmatprep.subr.bf16.mxu0 0
      %573 = vmatpush1.bf16.msra.mxu0 0
      %574 = vmatprep.subr.bf16.mxu0 0
      %575 = vmatpush1.bf16.msra.mxu0 0
      %576 = vmatprep.subr.bf16.mxu0 0
      %577 = vmatpush1.bf16.msra.mxu0 0
      %578 = vmatprep.subr.bf16.mxu0 0
      %579 = vmatpush1.bf16.msra.mxu0 0
      %580 = vmatprep.subr.bf16.mxu0 0
      %581 = vmatpush1.bf16.msra.mxu0 0
      %582 = vmatprep.subr.bf16.mxu0 0
      %583 = vmatpush1.bf16.msra.mxu0 0
      %584 = vmatprep.subr.bf16.mxu0 0
      %585 = vmatpush1.bf16.msra.mxu0 0
      %586 = vmatprep.subr.bf16.mxu0 0
      %587 = vmatpush1.bf16.msra.mxu0 0
      %588 = vmatprep.subr.bf16.mxu0 0
      %589 = vmatpush1.bf16.msra.mxu0 0
      %590 = vmatprep.subr.bf16.mxu0 0
      %591 = vmatpush1.bf16.msra.mxu0 0
      %592 = vmatprep.subr.bf16.mxu0 0
      %593 = vmatpush1.bf16.msra.mxu0 0
      %594 = vmatprep.mubr.bf16.mxu0 0
      %595 = vmatmul.mubr.bf16.gmra.mrb[0].mxu0 %v560
      %v596 = vpop.f32.mrb[0].mxu0
      %v597 = vadd.f32 0.0, %v596
      %v598 = vpop.f32.mrb[0].mxu0
      %v599 = vpop.f32.mrb[0].mxu0
      %v600 = vadd.f32 0.0, %v599
      %v601 = vpop.f32.mrb[0].mxu0
      %602 = vdwg.mxu0
      %v603 = vadd.f32 %v528, %v597
      %v604 = vadd.f32 %v531, %v600
      %v605 = vadd.f32 %v603, %v394
      %v606 = vadd.f32 %v604, %v394
      %v607 = vmul.f32 %v605, 0.5
      %v608 = vmul.f32 %v606, 0.5
      %v609 = vmul.f32 %v605, 0.044715
      %v610 = vmul.f32 %v606, 0.044715
      %v611 = vmul.f32 %v609, %v605
      %v612 = vmul.f32 %v610, %v606
      %v613 = vmul.f32 %v611, %v605
      %v614 = vmul.f32 %v612, %v606
      %v615 = vadd.f32 %v605, %v613
      %v616 = vadd.f32 %v606, %v614
      %v617 = vmul.f32 %v615, 0.7978846
      %v618 = vmul.f32 %v616, 0.7978846
      %v619 = vtanh.pop %v617
      %v620 = vtanh.pop %v618
      %v621 = vadd.f32 %v619, 1.0
      %v622 = vadd.f32 %v620, 1.0
      %v623 = vmul.f32 %v607, %v621
      %v624 = vmul.f32 %v608, %v622
      %v625 = vpack.c.bf16 %v369, %v368
      %v627 = vsel %vm421, %v625, 0
      %629 = vmatprep.subr.bf16.mxu0 0
      %630 = vmatpush1.bf16.msra.mxu0 %v413
      %631 = vmatprep.subr.bf16.mxu0 0
      %632 = vmatpush1.bf16.msra.mxu0 %v414
      %633 = vmatprep.subr.bf16.mxu0 0
      %634 = vmatpush1.bf16.msra.mxu0 %v415
      %635 = vmatprep.subr.bf16.mxu0 0
      %636 = vmatpush1.bf16.msra.mxu0 %v416
      %637 = vmatprep.subr.bf16.mxu0 0
      %638 = vmatpush1.bf16.msra.mxu0 0
      %639 = vmatprep.subr.bf16.mxu0 0
      %640 = vmatpush1.bf16.msra.mxu0 0
      %641 = vmatprep.subr.bf16.mxu0 0
      %642 = vmatpush1.bf16.msra.mxu0 0
      %643 = vmatprep.subr.bf16.mxu0 0
      %644 = vmatpush1.bf16.msra.mxu0 0
      %645 = vmatprep.subr.bf16.mxu0 0
      %646 = vmatpush1.bf16.msra.mxu0 0
      %647 = vmatprep.subr.bf16.mxu0 0
      %648 = vmatpush1.bf16.msra.mxu0 0
      %649 = vmatprep.subr.bf16.mxu0 0
      %650 = vmatpush1.bf16.msra.mxu0 0
      %651 = vmatprep.subr.bf16.mxu0 0
      %652 = vmatpush1.bf16.msra.mxu0 0
      %653 = vmatprep.subr.bf16.mxu0 0
      %654 = vmatpush1.bf16.msra.mxu0 0
      %655 = vmatprep.subr.bf16.mxu0 0
      %656 = vmatpush1.bf16.msra.mxu0 0
      %657 = vmatprep.subr.bf16.mxu0 0
      %658 = vmatpush1.bf16.msra.mxu0 0
      %659 = vmatprep.subr.bf16.mxu0 0
      %660 = vmatpush1.bf16.msra.mxu0 0
      %661 = vmatprep.mubr.bf16.mxu0 0
      %662 = vmatmul.mubr.bf16.gmra.mrb[0].mxu0 %v627
      %v663 = vpop.f32.mrb[0].mxu0
      %v664 = vadd.f32 0.0, %v663
      %v665 = vpop.f32.mrb[0].mxu0
      %v666 = vpop.f32.mrb[0].mxu0
      %v667 = vadd.f32 0.0, %v666
      %v668 = vpop.f32.mrb[0].mxu0
      %669 = vdwg.mxu0
      %670 = vmatprep.subr.bf16.mxu0 0
      %671 = vmatpush1.bf16.msra.mxu0 %v482
      %672 = vmatprep.subr.bf16.mxu0 0
      %673 = vmatpush1.bf16.msra.mxu0 %v483
      %674 = vmatprep.subr.bf16.mxu0 0
      %675 = vmatpush1.bf16.msra.mxu0 %v484
      %676 = vmatprep.subr.bf16.mxu0 0
      %677 = vmatpush1.bf16.msra.mxu0 %v485
      %678 = vmatprep.subr.bf16.mxu0 0
      %679 = vmatpush1.bf16.msra.mxu0 0
      %680 = vmatprep.subr.bf16.mxu0 0
      %681 = vmatpush1.bf16.msra.mxu0 0
      %682 = vmatprep.subr.bf16.mxu0 0
      %683 = vmatpush1.bf16.msra.mxu0 0
      %684 = vmatprep.subr.bf16.mxu0 0
      %685 = vmatpush1.bf16.msra.mxu0 0
      %686 = vmatprep.subr.bf16.mxu0 0
      %687 = vmatpush1.bf16.msra.mxu0 0
      %688 = vmatprep.subr.bf16.mxu0 0
      %689 = vmatpush1.bf16.msra.mxu0 0
      %690 = vmatprep.subr.bf16.mxu0 0
      %691 = vmatpush1.bf16.msra.mxu0 0
      %692 = vmatprep.subr.bf16.mxu0 0
      %693 = vmatpush1.bf16.msra.mxu0 0
      %694 = vmatprep.subr.bf16.mxu0 0
      %695 = vmatpush1.bf16.msra.mxu0 0
      %696 = vmatprep.subr.bf16.mxu0 0
      %697 = vmatpush1.bf16.msra.mxu0 0
      %698 = vmatprep.subr.bf16.mxu0 0
      %699 = vmatpush1.bf16.msra.mxu0 0
      %700 = vmatprep.subr.bf16.mxu0 0
      %701 = vmatpush1.bf16.msra.mxu0 0
      %702 = vmatprep.mubr.bf16.mxu0 0
      %703 = vmatmul.mubr.bf16.gmra.mrb[0].mxu0 %v560
      %v704 = vpop.f32.mrb[0].mxu0
      %v705 = vadd.f32 %v664, %v704
      %v706 = vpop.f32.mrb[0].mxu0
      %v707 = vpop.f32.mrb[0].mxu0
      %v708 = vadd.f32 %v667, %v707
      %v709 = vpop.f32.mrb[0].mxu0
      %710 = vdwg.mxu0
      %v711 = vshrl.u32 %v395, 16
      %v713 = vshll.u32 %v395, 16
      %v715 = vrot.slane %v713, 1
      %v716 = vor.u32 %v711, %v715
      %v718 = vsel %vm421, %v716, 0
      %720 = vmatprep.subr.bf16.mxu0 0
      %721 = vmatpush1.bf16.msra.mxu0 %v551
      %722 = vmatprep.subr.bf16.mxu0 0
      %723 = vmatpush1.bf16.msra.mxu0 %v552
      %724 = vmatprep.subr.bf16.mxu0 0
      %725 = vmatpush1.bf16.msra.mxu0 %v553
      %726 = vmatprep.subr.bf16.mxu0 0
      %727 = vmatpush1.bf16.msra.mxu0 %v554
      %728 = vmatprep.subr.bf16.mxu0 0
      %729 = vmatpush1.bf16.msra.mxu0 0
      %730 = vmatprep.subr.bf16.mxu0 0
      %731 = vmatpush1.bf16.msra.mxu0 0
      %732 = vmatprep.subr.bf16.mxu0 0
      %733 = vmatpush1.bf16.msra.mxu0 0
      %734 = vmatprep.subr.bf16.mxu0 0
      %735 = vmatpush1.bf16.msra.mxu0 0
      %736 = vmatprep.subr.bf16.mxu0 0
      %737 = vmatpush1.bf16.msra.mxu0 0
      %738 = vmatprep.subr.bf16.mxu0 0
      %739 = vmatpush1.bf16.msra.mxu0 0
      %740 = vmatprep.subr.bf16.mxu0 0
      %741 = vmatpush1.bf16.msra.mxu0 0
      %742 = vmatprep.subr.bf16.mxu0 0
      %743 = vmatpush1.bf16.msra.mxu0 0
      %744 = vmatprep.subr.bf16.mxu0 0
      %745 = vmatpush1.bf16.msra.mxu0 0
      %746 = vmatprep.subr.bf16.mxu0 0
      %747 = vmatpush1.bf16.msra.mxu0 0
      %748 = vmatprep.subr.bf16.mxu0 0
      %749 = vmatpush1.bf16.msra.mxu0 0
      %750 = vmatprep.subr.bf16.mxu0 0
      %751 = vmatpush1.bf16.msra.mxu0 0
      %752 = vmatprep.mubr.bf16.mxu0 0
      %753 = vmatmul.mubr.bf16.gmra.mrb[0].mxu0 %v718
      %v754 = vpop.f32.mrb[0].mxu0
      %v755 = vadd.f32 0.0, %v754
      %v756 = vpop.f32.mrb[0].mxu0
      %v757 = vpop.f32.mrb[0].mxu0
      %v758 = vadd.f32 0.0, %v757
      %v759 = vpop.f32.mrb[0].mxu0
      %760 = vdwg.mxu0
      %v761 = vadd.f32 %v705, %v755
      %v762 = vadd.f32 %v708, %v758
      %v763 = vadd.f32 %v761, %v394
      %v764 = vadd.f32 %v762, %v394
      %v765 = vmul.f32 %v763, 0.5
      %v766 = vmul.f32 %v764, 0.5
      %v767 = vmul.f32 %v763, 0.044715
      %v768 = vmul.f32 %v764, 0.044715
      %v769 = vmul.f32 %v767, %v763
      %v770 = vmul.f32 %v768, %v764
      %v771 = vmul.f32 %v769, %v763
      %v772 = vmul.f32 %v770, %v764
      %v773 = vadd.f32 %v763, %v771
      %v774 = vadd.f32 %v764, %v772
      %v775 = vmul.f32 %v773, 0.7978846
      %v776 = vmul.f32 %v774, 0.7978846
      %v777 = vtanh.pop %v775
      %v778 = vtanh.pop %v776
      %v779 = vadd.f32 %v777, 1.0
      %v780 = vadd.f32 %v778, 1.0
      %v781 = vmul.f32 %v765, %v779
      %v782 = vmul.f32 %v766, %v780
      %v783 = vld [vmem:[%s1 + $0x68] sm:$0xf]
      %v784 = vld [vmem:[%s1 + $0x6c] sm:$0xf]
      %v785 = vld [vmem:[%s1 + $0x70] sm:$0xf]
      %v786 = vld [vmem:[%s1 + $0x74] sm:$0xf]
      %v787 = vld [vmem:[%s1 + $0x78] sm:$0xf]
      %v788 = vld [vmem:[%s1 + $0x7c] sm:$0xf]
      %v789 = vld [vmem:[%s1 + $0x80] sm:$0xf]
      %v790 = vld [vmem:[%s1 + $0x84] sm:$0xf]
      %v791 = vpack.c.bf16 %v624, %v623
      %v792 = vld [vmem:[%s1 + $0x88] sm:$0xf]
      %v793 = vld [vmem:[%s1 + $0x8c] sm:$0xf]
      %v794 = vld [vmem:[%s1 + $0x90] sm:$0xf]
      %v795 = vld [vmem:[%s1 + $0x94] sm:$0xf]
      %v796 = vld [vmem:[%s1 + $0x98] sm:$0xf]
      %v797 = vld [vmem:[%s1 + $0x9c] sm:$0xf]
      %v798 = vld [vmem:[%s1 + $0xa0] sm:$0xf]
      %v799 = vld [vmem:[%s1 + $0xa4] sm:$0xf]
      %v800 = vpack.c.bf16 %v782, %v781
      %v809 = vunpack.c.l.b16 %v792
      %v810 = vunpack.c.l.b16 %v793
      %v811 = vunpack.c.l.b16 %v794
      %v812 = vunpack.c.l.b16 %v795
      %v813 = vunpack.c.l.b16 %v796
      %v814 = vunpack.c.l.b16 %v797
      %v815 = vunpack.c.l.b16 %v798
      %v816 = vunpack.c.l.b16 %v799
      %v817 = vpack.c.b16 %v810, %v809
      %v818 = vpack.c.b16 %v812, %v811
      %v819 = vpack.c.b16 %v814, %v813
      %v820 = vpack.c.b16 %v816, %v815
      %v826 = vsel %vm421, %v800, 0
      %828 = vmatprep.subr.bf16.mxu0 0
      %829 = vmatpush1.bf16.msra.mxu0 %v817
      %830 = vmatprep.subr.bf16.mxu0 0
      %831 = vmatpush1.bf16.msra.mxu0 %v818
      %832 = vmatprep.subr.bf16.mxu0 0
      %833 = vmatpush1.bf16.msra.mxu0 %v819
      %834 = vmatprep.subr.bf16.mxu0 0
      %835 = vmatpush1.bf16.msra.mxu0 %v820
      %836 = vmatprep.subr.bf16.mxu0 0
      %837 = vmatpush1.bf16.msra.mxu0 0
      %838 = vmatprep.subr.bf16.mxu0 0
      %839 = vmatpush1.bf16.msra.mxu0 0
      %840 = vmatprep.subr.bf16.mxu0 0
      %841 = vmatpush1.bf16.msra.mxu0 0
      %842 = vmatprep.subr.bf16.mxu0 0
      %843 = vmatpush1.bf16.msra.mxu0 0
      %844 = vmatprep.subr.bf16.mxu0 0
      %845 = vmatpush1.bf16.msra.mxu0 0
      %846 = vmatprep.subr.bf16.mxu0 0
      %847 = vmatpush1.bf16.msra.mxu0 0
      %848 = vmatprep.subr.bf16.mxu0 0
      %849 = vmatpush1.bf16.msra.mxu0 0
      %850 = vmatprep.subr.bf16.mxu0 0
      %851 = vmatpush1.bf16.msra.mxu0 0
      %852 = vmatprep.subr.bf16.mxu0 0
      %853 = vmatpush1.bf16.msra.mxu0 0
      %854 = vmatprep.subr.bf16.mxu0 0
      %855 = vmatpush1.bf16.msra.mxu0 0
      %856 = vmatprep.subr.bf16.mxu0 0
      %857 = vmatpush1.bf16.msra.mxu0 0
      %858 = vmatprep.subr.bf16.mxu0 0
      %859 = vmatpush1.bf16.msra.mxu0 0
      %860 = vmatprep.mubr.bf16.mxu0 0
      %861 = vmatmul.mubr.bf16.gmra.mrb[0].mxu0 %v826
      %v862 = vpop.f32.mrb[0].mxu0
      %v863 = vadd.f32 0.0, %v862
      %v864 = vpop.f32.mrb[0].mxu0
      %v865 = vpop.f32.mrb[0].mxu0
      %v866 = vadd.f32 0.0, %v865
      %v867 = vpop.f32.mrb[0].mxu0
      %868 = vdwg.mxu0
      %v877 = vunpack.c.l.b16 %v783
      %v878 = vunpack.c.l.b16 %v784
      %v879 = vunpack.c.l.b16 %v785
      %v880 = vunpack.c.l.b16 %v786
      %v881 = vunpack.c.l.b16 %v787
      %v882 = vunpack.c.l.b16 %v788
      %v883 = vunpack.c.l.b16 %v789
      %v884 = vunpack.c.l.b16 %v790
      %v885 = vpack.c.b16 %v878, %v877
      %v886 = vpack.c.b16 %v880, %v879
      %v887 = vpack.c.b16 %v882, %v881
      %v888 = vpack.c.b16 %v884, %v883
      %v894 = vsel %vm421, %v791, 0
      %896 = vmatprep.subr.bf16.mxu0 0
      %897 = vmatpush1.bf16.msra.mxu0 %v885
      %898 = vmatprep.subr.bf16.mxu0 0
      %899 = vmatpush1.bf16.msra.mxu0 %v886
      %900 = vmatprep.subr.bf16.mxu0 0
      %901 = vmatpush1.bf16.msra.mxu0 %v887
      %902 = vmatprep.subr.bf16.mxu0 0
      %903 = vmatpush1.bf16.msra.mxu0 %v888
      %904 = vmatprep.subr.bf16.mxu0 0
      %905 = vmatpush1.bf16.msra.mxu0 0
      %906 = vmatprep.subr.bf16.mxu0 0
      %907 = vmatpush1.bf16.msra.mxu0 0
      %908 = vmatprep.subr.bf16.mxu0 0
      %909 = vmatpush1.bf16.msra.mxu0 0
      %910 = vmatprep.subr.bf16.mxu0 0
      %911 = vmatpush1.bf16.msra.mxu0 0
      %912 = vmatprep.subr.bf16.mxu0 0
      %913 = vmatpush1.bf16.msra.mxu0 0
      %914 = vmatprep.subr.bf16.mxu0 0
      %915 = vmatpush1.bf16.msra.mxu0 0
      %916 = vmatprep.subr.bf16.mxu0 0
      %917 = vmatpush1.bf16.msra.mxu0 0
      %918 = vmatprep.subr.bf16.mxu0 0
      %919 = vmatpush1.bf16.msra.mxu0 0
      %920 = vmatprep.subr.bf16.mxu0 0
      %921 = vmatpush1.bf16.msra.mxu0 0
      %922 = vmatprep.subr.bf16.mxu0 0
      %923 = vmatpush1.bf16.msra.mxu0 0
      %924 = vmatprep.subr.bf16.mxu0 0
      %925 = vmatpush1.bf16.msra.mxu0 0
      %926 = vmatprep.subr.bf16.mxu0 0
      %927 = vmatpush1.bf16.msra.mxu0 0
      %928 = vmatprep.mubr.bf16.mxu0 0
      %929 = vmatmul.mubr.bf16.gmra.mrb[0].mxu0 %v894
      %v930 = vpop.f32.mrb[0].mxu0
      %v931 = vadd.f32 %v863, %v930
      %v932 = vpop.f32.mrb[0].mxu0
      %v933 = vpop.f32.mrb[0].mxu0
      %v934 = vadd.f32 %v866, %v933
      %v935 = vpop.f32.mrb[0].mxu0
      %936 = vdwg.mxu0
      %v937 = vld [vmem:[%s3 + $0x2] ss:$0 sm:$0xff]
      %v938 = vadd.f32 %v931, %v937
      %v939 = vadd.f32 %v934, %v937
      %v940 = vmul.f32 %v938, 0.5
      %v941 = vmul.f32 %v939, 0.5
      %v942 = vmul.f32 %v938, 0.044715
      %v943 = vmul.f32 %v939, 0.044715
      %v944 = vmul.f32 %v942, %v938
      %v945 = vmul.f32 %v943, %v939
      %v946 = vmul.f32 %v944, %v938
      %v947 = vmul.f32 %v945, %v939
      %v948 = vadd.f32 %v938, %v946
      %v949 = vadd.f32 %v939, %v947
      %v950 = vmul.f32 %v948, 0.7978846
      %v951 = vmul.f32 %v949, 0.7978846
      %v952 = vtanh.pop %v950
      %v953 = vtanh.pop %v951
      %v954 = vadd.f32 %v952, 1.0
      %v955 = vadd.f32 %v953, 1.0
      %v956 = vmul.f32 %v940, %v954
      %v957 = vmul.f32 %v941, %v955
      %v958 = vsel %vm421, %v956, 0.0
      %959 = vadd.xlane.f32.xlu0 %v958
      %v960 = vpop.xlane.xlu0 %959
      %vm961 = vcmask 522240
      %v962 = vsel %vm961, %v957, 0.0
      %963 = vadd.xlane.f32.xlu0 %v962
      %v964 = vpop.xlane.xlu0 %963
      %v965 = vrcp.pop 64.0
      %v966 = vmul.f32 %v960, %v965
      %v967 = vmul.f32 %v964, %v965
      %v968 = vsub.f32 %v956, %v966
      %v969 = vsub.f32 %v957, %v967
      %v970 = vmul.f32 %v968, %v968
      %v971 = vmul.f32 %v969, %v969
      %v972 = vsel %vm421, %v970, 0.0
      %973 = vadd.xlane.f32.xlu0 %v972
      %v974 = vpop.xlane.xlu0 %973
      %v975 = vsel %vm961, %v971, 0.0
      %976 = vadd.xlane.f32.xlu0 %v975
      %v977 = vpop.xlane.xlu0 %976
      %v978 = vmul.f32 %v974, %v965
      %v979 = vmul.f32 %v977, %v965
      %v980 = vadd.f32 %v978, 1e-05
      %v981 = vadd.f32 %v979, 1e-05
      %v982 = vrsqrt.pop %v980
      %v983 = vrsqrt.pop %v981
      %v984 = vmul.f32 %v968, %v982
      %v985 = vmul.f32 %v969, %v983
      %v986 = vld [vmem:[%s3 + $0x3] ss:$0 sm:$0xff]
      %v987 = vmul.f32 %v984, %v986
      %v988 = vmul.f32 %v985, %v986
      %v989 = vld [vmem:[%s3 + $0x4] ss:$0 sm:$0xff]
      %v990 = vadd.f32 %v987, %v989
      %v991 = vadd.f32 %v988, %v989
      %v992 = vld [vmem:[%s1 + $0xa8] sm:$0xf]
      %v993 = vld [vmem:[%s1 + $0xac] sm:$0xf]
      %v994 = vld [vmem:[%s1 + $0xb0] sm:$0xf]
      %v995 = vld [vmem:[%s1 + $0xb4] sm:$0xf]
      %v996 = vld [vmem:[%s1 + $0xb8] sm:$0xf]
      %v997 = vld [vmem:[%s1 + $0xbc] sm:$0xf]
      %v998 = vld [vmem:[%s1 + $0xc0] sm:$0xf]
      %v999 = vld [vmem:[%s1 + $0xc4] sm:$0xf]
      %v1000 = vpack.c.bf16 %v991, %v990
      %v1001 = vld [vmem:[%s3 + $0x5] ss:$0 sm:$0xff]
      %v1010 = vunpack.c.l.b16 %v992
      %v1011 = vunpack.c.l.b16 %v993
      %v1012 = vunpack.c.l.b16 %v994
      %v1013 = vunpack.c.l.b16 %v995
      %v1014 = vunpack.c.l.b16 %v996
      %v1015 = vunpack.c.l.b16 %v997
      %v1016 = vunpack.c.l.b16 %v998
      %v1017 = vunpack.c.l.b16 %v999
      %v1018 = vpack.c.b16 %v1011, %v1010
      %v1019 = vpack.c.b16 %v1013, %v1012
      %v1020 = vpack.c.b16 %v1015, %v1014
      %v1021 = vpack.c.b16 %v1017, %v1016
      %v1027 = vsel %vm421, %v1000, 0
      %1029 = vmatprep.subr.bf16.mxu0 0
      %1030 = vmatpush1.bf16.msra.mxu0 %v1018
      %1031 = vmatprep.subr.bf16.mxu0 0
      %1032 = vmatpush1.bf16.msra.mxu0 %v1019
      %1033 = vmatprep.subr.bf16.mxu0 0
      %1034 = vmatpush1.bf16.msra.mxu0 %v1020
      %1035 = vmatprep.subr.bf16.mxu0 0
      %1036 = vmatpush1.bf16.msra.mxu0 %v1021
      %1037 = vmatprep.subr.bf16.mxu0 0
      %1038 = vmatpush1.bf16.msra.mxu0 0
      %1039 = vmatprep.subr.bf16.mxu0 0
      %1040 = vmatpush1.bf16.msra.mxu0 0
      %1041 = vmatprep.subr.bf16.mxu0 0
      %1042 = vmatpush1.bf16.msra.mxu0 0
      %1043 = vmatprep.subr.bf16.mxu0 0
      %1044 = vmatpush1.bf16.msra.mxu0 0
      %1045 = vmatprep.subr.bf16.mxu0 0
      %1046 = vmatpush1.bf16.msra.mxu0 0
      %1047 = vmatprep.subr.bf16.mxu0 0
      %1048 = vmatpush1.bf16.msra.mxu0 0
      %1049 = vmatprep.subr.bf16.mxu0 0
      %1050 = vmatpush1.bf16.msra.mxu0 0
      %1051 = vmatprep.subr.bf16.mxu0 0
      %1052 = vmatpush1.bf16.msra.mxu0 0
      %1053 = vmatprep.subr.bf16.mxu0 0
      %1054 = vmatpush1.bf16.msra.mxu0 0
      %1055 = vmatprep.subr.bf16.mxu0 0
      %1056 = vmatpush1.bf16.msra.mxu0 0
      %1057 = vmatprep.subr.bf16.mxu0 0
      %1058 = vmatpush1.bf16.msra.mxu0 0
      %1059 = vmatprep.subr.bf16.mxu0 0
      %1060 = vmatpush1.bf16.msra.mxu0 0
      %1061 = vmatprep.mubr.bf16.mxu0 0
      %1062 = vmatmul.mubr.bf16.gmra.mrb[0].mxu0 %v1027
      %v1063 = vpop.f32.mrb[0].mxu0
      %v1064 = vadd.f32 %v1001, %v1063
      %v1065 = vpop.f32.mrb[0].mxu0
      %v1066 = vpop.f32.mrb[0].mxu0
      %v1067 = vadd.f32 %v1001, %v1066
      %v1068 = vpop.f32.mrb[0].mxu0
      %1069 = vdwg.mxu0
      %v1070 = vsel %vm421, %v1064, 0.0
      %1071 = vadd.xlane.f32.xlu0 %v1070
      %v1072 = vpop.xlane.xlu0 %1071
      %v1073 = vsel %vm961, %v1067, 0.0
      %1074 = vadd.xlane.f32.xlu0 %v1073
      %v1075 = vpop.xlane.xlu0 %1074
      %v1076 = vmul.f32 %v1072, %v965
      %v1077 = vmul.f32 %v1075, %v965
      %v1078 = vsub.f32 %v1064, %v1076
      %v1079 = vsub.f32 %v1067, %v1077
      %v1080 = vmul.f32 %v1078, %v1078
      %v1081 = vmul.f32 %v1079, %v1079
      %v1082 = vsel %vm421, %v1080, 0.0
      %1083 = vadd.xlane.f32.xlu0 %v1082
      %v1084 = vpop.xlane.xlu0 %1083
      %v1085 = vsel %vm961, %v1081, 0.0
      %1086 = vadd.xlane.f32.xlu0 %v1085
      %v1087 = vpop.xlane.xlu0 %1086
      %v1088 = vmul.f32 %v1084, %v965
      %v1089 = vmul.f32 %v1087, %v965
      %v1090 = vadd.f32 %v1088, 1e-05
      %v1091 = vadd.f32 %v1089, 1e-05
      %v1092 = vrsqrt.pop %v1090
      %v1093 = vrsqrt.pop %v1091
      %v1094 = vmul.f32 %v1078, %v1092
      %v1095 = vmul.f32 %v1079, %v1093
      %v1096 = vld [vmem:[%s3 + $0x6] ss:$0 sm:$0xff]
      %v1097 = vmul.f32 %v1094, %v1096
      %v1098 = vmul.f32 %v1095, %v1096
      %v1099 = vld [vmem:[%s3 + $0x7] ss:$0 sm:$0xff]
      %v1100 = vadd.f32 %v1097, %v1099
      %v1101 = vadd.f32 %v1098, %v1099
      %v1102 = vld [vmem:[%s2] sm:$0xff]
      %v1103 = vld [vmem:[%s2 + $0xc] sm:$0xff]
      %v1104 = vld [vmem:[%s2 + $0x18] sm:$0xff]
      %v1105 = vld [vmem:[%s2 + $0x24] sm:$0xff]
      %v1106 = vld [vmem:[%s2 + $0x30] sm:$0xff]
      %v1107 = vld [vmem:[%s2 + $0x3c] sm:$0xff]
      %v1108 = vld [vmem:[%s2 + $0x48] sm:$0xff]
      %v1109 = vld [vmem:[%s2 + $0x54] sm:$0xff]
      %v1110 = vpack.c.bf16 %v1101, %v1100
      %s1111 = scalar_lea.vmem %s3, 16
      %v1112 = vld [vmem:[%s1111] ss:$8 sm:$0x3]
      %v1114 = vlaneseq
      %v1115 = vshrl.u32 %v1114, 7
      %v1116 = vsub.s32 0, %v1115
      %v1117 = vrot.slane %v1112, %v1116
      %v1118 = vlaneseq
      %v1119 = vshrl.u32 %v1118, 7
      %v1120 = vsub.s32 1, %v1119
      %v1121 = vrot.slane %v1112, %v1120
      %v1132 = vunpack.c.l.b16 %v1102
      %v1133 = vunpack.c.h.b16 %v1102
      %v1134 = vunpack.c.l.b16 %v1103
      %v1135 = vunpack.c.h.b16 %v1103
      %v1136 = vunpack.c.l.b16 %v1104
      %v1137 = vunpack.c.h.b16 %v1104
      %v1138 = vunpack.c.l.b16 %v1105
      %v1139 = vunpack.c.h.b16 %v1105
      %v1140 = vunpack.c.l.b16 %v1106
      %v1141 = vunpack.c.h.b16 %v1106
      %v1142 = vunpack.c.l.b16 %v1107
      %v1143 = vunpack.c.h.b16 %v1107
      %v1144 = vunpack.c.l.b16 %v1108
      %v1145 = vunpack.c.h.b16 %v1108
      %v1146 = vunpack.c.l.b16 %v1109
      %v1147 = vunpack.c.h.b16 %v1109
      %v1148 = vpack.c.b16 %v1134, %v1132
      %v1149 = vpack.c.b16 %v1135, %v1133
      %v1150 = vpack.c.b16 %v1138, %v1136
      %v1151 = vpack.c.b16 %v1139, %v1137
      %v1152 = vpack.c.b16 %v1142, %v1140
      %v1153 = vpack.c.b16 %v1143, %v1141
      %v1154 = vpack.c.b16 %v1146, %v1144
      %v1155 = vpack.c.b16 %v1147, %v1145
      %v1165 = vsel %vm421, %v1110, 0
      %1167 = vmatprep.subr.bf16.mxu0 %v1149
      %1168 = vmatpush1.bf16.msra.mxu0 %v1148
      %1169 = vmatprep.subr.bf16.mxu0 %v1151
      %1170 = vmatpush1.bf16.msra.mxu0 %v1150
      %1171 = vmatprep.subr.bf16.mxu0 %v1153
      %1172 = vmatpush1.bf16.msra.mxu0 %v1152
      %1173 = vmatprep.subr.bf16.mxu0 %v1155
      %1174 = vmatpush1.bf16.msra.mxu0 %v1154
      %1175 = vmatprep.subr.bf16.mxu0 0
      %1176 = vmatpush1.bf16.msra.mxu0 0
      %1177 = vmatprep.subr.bf16.mxu0 0
      %1178 = vmatpush1.bf16.msra.mxu0 0
      %1179 = vmatprep.subr.bf16.mxu0 0
      %1180 = vmatpush1.bf16.msra.mxu0 0
      %1181 = vmatprep.subr.bf16.mxu0 0
      %1182 = vmatpush1.bf16.msra.mxu0 0
      %1183 = vmatprep.subr.bf16.mxu0 0
      %1184 = vmatpush1.bf16.msra.mxu0 0
      %1185 = vmatprep.subr.bf16.mxu0 0
      %1186 = vmatpush1.bf16.msra.mxu0 0
      %1187 = vmatprep.subr.bf16.mxu0 0
      %1188 = vmatpush1.bf16.msra.mxu0 0
      %1189 = vmatprep.subr.bf16.mxu0 0
      %1190 = vmatpush1.bf16.msra.mxu0 0
      %1191 = vmatprep.subr.bf16.mxu0 0
      %1192 = vmatpush1.bf16.msra.mxu0 0
      %1193 = vmatprep.subr.bf16.mxu0 0
      %1194 = vmatpush1.bf16.msra.mxu0 0
      %1195 = vmatprep.subr.bf16.mxu0 0
      %1196 = vmatpush1.bf16.msra.mxu0 0
      %1197 = vmatprep.subr.bf16.mxu0 0
      %1198 = vmatpush1.bf16.msra.mxu0 0
      %1199 = vmatprep.mubr.bf16.mxu0 0
      %1200 = vmatmul.mubr.bf16.gmra.mrb[0].mxu0 %v1165
      %v1201 = vpop.f32.mrb[0].mxu0
      %v1202 = vadd.f32 %v1117, %v1201
      %v1203 = vpop.f32.mrb[0].mxu0
      %v1204 = vadd.f32 %v1121, %v1203
      %v1205 = vpop.f32.mrb[0].mxu0
      %v1206 = vadd.f32 %v1117, %v1205
      %v1207 = vpop.f32.mrb[0].mxu0
      %v1208 = vadd.f32 %v1121, %v1207
      %1209 = vdwg.mxu0
      %v1210 = vpack.c.bf16 %v1206, %v1202
      %1212 = vrot.lane.b32.xlu0 %v1210, 64
      %v1213 = vpop.permute.xlu0 %1212
      %v1215 = vsel %vm220, %v1210, 0
      %v1218 = vsel %vm220, %v1213, 0
      %1220 = vmatprep.subr.bf16.mxu0 0
      %1221 = vmatpush1.bf16.xpose.msra.mxu0 %v1218
      %1222 = vmatprep.subr.bf16.mxu0 0
      %1223 = vmatpush1.bf16.xpose.msra.mxu0 0
      %1224 = vmatprep.subr.bf16.mxu0 0
      %1225 = vmatpush1.bf16.xpose.msra.mxu0 0
      %1226 = vmatprep.subr.bf16.mxu0 0
      %1227 = vmatpush1.bf16.xpose.msra.mxu0 0
      %1228 = vmatprep.subr.bf16.mxu0 0
      %1229 = vmatpush1.bf16.xpose.msra.mxu0 0
      %1230 = vmatprep.subr.bf16.mxu0 0
      %1231 = vmatpush1.bf16.xpose.msra.mxu0 0
      %1232 = vmatprep.subr.bf16.mxu0 0
      %1233 = vmatpush1.bf16.xpose.msra.mxu0 0
      %1234 = vmatprep.subr.bf16.mxu0 0
      %1235 = vmatpush1.bf16.xpose.msra.mxu0 0
      %1236 = vmatprep.subr.bf16.mxu0 0
      %1237 = vmatpush1.bf16.xpose.msra.mxu0 0
      %1238 = vmatprep.subr.bf16.mxu0 0
      %1239 = vmatpush1.bf16.xpose.msra.mxu0 0
      %1240 = vmatprep.subr.bf16.mxu0 0
      %1241 = vmatpush1.bf16.xpose.msra.mxu0 0
      %1242 = vmatprep.subr.bf16.mxu0 0
      %1243 = vmatpush1.bf16.xpose.msra.mxu0 0
      %1244 = vmatprep.subr.bf16.mxu0 0
      %1245 = vmatpush1.bf16.xpose.msra.mxu0 0
      %1246 = vmatprep.subr.bf16.mxu0 0
      %1247 = vmatpush1.bf16.xpose.msra.mxu0 0
      %1248 = vmatprep.subr.bf16.mxu0 0
      %1249 = vmatpush1.bf16.xpose.msra.mxu0 0
      %1250 = vmatprep.subr.bf16.mxu0 0
      %1251 = vmatpush1.bf16.xpose.msra.mxu0 0
      %1252 = vmatprep.mubr.bf16.mxu0 0
      %1253 = vmatmul.mubr.bf16.gmra.mrb[0].mxu0 %v1215
      %v1254 = vpop.f32.mrb[0].mxu0
      %v1255 = vadd.f32 0.0, %v1254
      %v1256 = vpop.f32.mrb[0].mxu0
      %v1257 = vpop.f32.mrb[0].mxu0
      %v1258 = vadd.f32 0.0, %v1257
      %v1259 = vpop.f32.mrb[0].mxu0
      %1260 = vdwg.mxu0
      %v1261 = vmul.f32 %v1255, 0.25
      %v1262 = vmul.f32 %v1258, 0.25
      %vm1263 = vcmask 121856
      %v1264 = vsel %vm1263, %v1261, -inf
      %1265 = vmax.xlane.f32.xlu0 %v1264
      %v1266 = vpop.xlane.xlu0 %1265
      %vm1267 = vcmask 120832
      %v1268 = vsel %vm1267, %v1262, -inf
      %1269 = vmax.xlane.f32.xlu0 %v1268
      %v1270 = vpop.xlane.xlu0 %1269
      %v1271 = vsub.f32 %v1261, %v1266
      %v1272 = vsub.f32 %v1262, %v1270
      %v1273 = vmul.f32 %v1271, 1.442695
      %v1274 = vpow.pop %v1273
      %v1275 = vmul.f32 %v1272, 1.442695
      %v1276 = vpow.pop %v1275
      %v1277 = vsel %vm1263, %v1274, 0.0
      %1278 = vadd.xlane.f32.xlu0 %v1277
      %v1279 = vpop.xlane.xlu0 %1278
      %v1280 = vsel %vm1267, %v1276, 0.0
      %1281 = vadd.xlane.f32.xlu0 %v1280
      %v1282 = vpop.xlane.xlu0 %1281
      %v1283 = vrcp.pop %v1279
      %v1284 = vrcp.pop %v1282
      %v1285 = vmul.f32 %v1274, %v1283
      %v1286 = vmul.f32 %v1276, %v1284
      %v1287 = vpack.c.bf16 %v1286, %v1285
      %v1288 = vpack.c.bf16 %v1208, %v1204
      %v1290 = vsel %vm1263, %v1287, 0
      %vm1292 = vcmask 1046528
      %vm1293 = vcmask 1047552
      %v1294 = vsel %vm1292, 4294967295, 65535
      %v1295 = vsel %vm1293, %v1294, 0
      %v1297 = vand.u32 %v1288, %v1295
      %1299 = vmatprep.subr.bf16.mxu0 0
      %1300 = vmatpush1.bf16.msra.mxu0 %v1297
      %1301 = vmatprep.subr.bf16.mxu0 0
      %1302 = vmatpush1.bf16.msra.mxu0 0
      %1303 = vmatprep.subr.bf16.mxu0 0
      %1304 = vmatpush1.bf16.msra.mxu0 0
      %1305 = vmatprep.subr.bf16.mxu0 0
      %1306 = vmatpush1.bf16.msra.mxu0 0
      %1307 = vmatprep.subr.bf16.mxu0 0
      %1308 = vmatpush1.bf16.msra.mxu0 0
      %1309 = vmatprep.subr.bf16.mxu0 0
      %1310 = vmatpush1.bf16.msra.mxu0 0
      %1311 = vmatprep.subr.bf16.mxu0 0
      %1312 = vmatpush1.bf16.msra.mxu0 0
      %1313 = vmatprep.subr.bf16.mxu0 0
      %1314 = vmatpush1.bf16.msra.mxu0 0
      %1315 = vmatprep.subr.bf16.mxu0 0
      %1316 = vmatpush1.bf16.msra.mxu0 0
      %1317 = vmatprep.subr.bf16.mxu0 0
      %1318 = vmatpush1.bf16.msra.mxu0 0
      %1319 = vmatprep.subr.bf16.mxu0 0
      %1320 = vmatpush1.bf16.msra.mxu0 0
      %1321 = vmatprep.subr.bf16.mxu0 0
      %1322 = vmatpush1.bf16.msra.mxu0 0
      %1323 = vmatprep.subr.bf16.mxu0 0
      %1324 = vmatpush1.bf16.msra.mxu0 0
      %1325 = vmatprep.subr.bf16.mxu0 0
      %1326 = vmatpush1.bf16.msra.mxu0 0
      %1327 = vmatprep.subr.bf16.mxu0 0
      %1328 = vmatpush1.bf16.msra.mxu0 0
      %1329 = vmatprep.subr.bf16.mxu0 0
      %1330 = vmatpush1.bf16.msra.mxu0 0
      %1331 = vmatprep.mubr.bf16.mxu0 0
      %1332 = vmatmul.mubr.bf16.gmra.mrb[0].mxu0 %v1290
      %v1333 = vpop.f32.mrb[0].mxu0
      %v1334 = vadd.f32 0.0, %v1333
      %v1335 = vpop.f32.mrb[0].mxu0
      %v1336 = vpop.f32.mrb[0].mxu0
      %v1337 = vadd.f32 0.0, %v1336
      %v1338 = vpop.f32.mrb[0].mxu0
      %1339 = vdwg.mxu0
      %1340 = vrot.lane.b32.xlu0 %v1210, 112
      %v1341 = vpop.permute.xlu0 %1340
      %1342 = vrot.lane.b32.xlu0 %v1210, 48
      %v1343 = vpop.permute.xlu0 %1342
      %v1345 = vsel %vm220, %v1341, 0
      %v1348 = vsel %vm220, %v1343, 0
      %1350 = vmatprep.subr.bf16.mxu0 0
      %1351 = vmatpush1.bf16.xpose.msra.mxu0 %v1348
      %1352 = vmatprep.subr.bf16.mxu0 0
      %1353 = vmatpush1.bf16.xpose.msra.mxu0 0
      %1354 = vmatprep.subr.bf16.mxu0 0
      %1355 = vmatpush1.bf16.xpose.msra.mxu0 0
      %1356 = vmatprep.subr.bf16.mxu0 0
      %1357 = vmatpush1.bf16.xpose.msra.mxu0 0
      %1358 = vmatprep.subr.bf16.mxu0 0
      %1359 = vmatpush1.bf16.xpose.msra.mxu0 0
      %1360 = vmatprep.subr.bf16.mxu0 0
      %1361 = vmatpush1.bf16.xpose.msra.mxu0 0
      %1362 = vmatprep.subr.bf16.mxu0 0
      %1363 = vmatpush1.bf16.xpose.msra.mxu0 0
      %1364 = vmatprep.subr.bf16.mxu0 0
      %1365 = vmatpush1.bf16.xpose.msra.mxu0 0
      %1366 = vmatprep.subr.bf16.mxu0 0
      %1367 = vmatpush1.bf16.xpose.msra.mxu0 0
      %1368 = vmatprep.subr.bf16.mxu0 0
      %1369 = vmatpush1.bf16.xpose.msra.mxu0 0
      %1370 = vmatprep.subr.bf16.mxu0 0
      %1371 = vmatpush1.bf16.xpose.msra.mxu0 0
      %1372 = vmatprep.subr.bf16.mxu0 0
      %1373 = vmatpush1.bf16.xpose.msra.mxu0 0
      %1374 = vmatprep.subr.bf16.mxu0 0
      %1375 = vmatpush1.bf16.xpose.msra.mxu0 0
      %1376 = vmatprep.subr.bf16.mxu0 0
      %1377 = vmatpush1.bf16.xpose.msra.mxu0 0
      %1378 = vmatprep.subr.bf16.mxu0 0
      %1379 = vmatpush1.bf16.xpose.msra.mxu0 0
      %1380 = vmatprep.subr.bf16.mxu0 0
      %1381 = vmatpush1.bf16.xpose.msra.mxu0 0
      %1382 = vmatprep.mubr.bf16.mxu0 0
      %1383 = vmatmul.mubr.bf16.gmra.mrb[0].mxu0 %v1345
      %v1384 = vpop.f32.mrb[0].mxu0
      %v1385 = vadd.f32 0.0, %v1384
      %v1386 = vpop.f32.mrb[0].mxu0
      %v1387 = vpop.f32.mrb[0].mxu0
      %v1388 = vadd.f32 0.0, %v1387
      %v1389 = vpop.f32.mrb[0].mxu0
      %1390 = vdwg.mxu0
      %v1391 = vmul.f32 %v1385, 0.25
      %v1392 = vmul.f32 %v1388, 0.25
      %v1393 = vsel %vm1263, %v1391, -inf
      %1394 = vmax.xlane.f32.xlu0 %v1393
      %v1395 = vpop.xlane.xlu0 %1394
      %v1396 = vsel %vm1267, %v1392, -inf
      %1397 = vmax.xlane.f32.xlu0 %v1396
      %v1398 = vpop.xlane.xlu0 %1397
      %v1399 = vsub.f32 %v1391, %v1395
      %v1400 = vsub.f32 %v1392, %v1398
      %v1401 = vmul.f32 %v1399, 1.442695
      %v1402 = vpow.pop %v1401
      %v1403 = vmul.f32 %v1400, 1.442695
      %v1404 = vpow.pop %v1403
      %v1405 = vsel %vm1263, %v1402, 0.0
      %1406 = vadd.xlane.f32.xlu0 %v1405
      %v1407 = vpop.xlane.xlu0 %1406
      %v1408 = vsel %vm1267, %v1404, 0.0
      %1409 = vadd.xlane.f32.xlu0 %v1408
      %v1410 = vpop.xlane.xlu0 %1409
      %v1411 = vrcp.pop %v1407
      %v1412 = vrcp.pop %v1410
      %v1413 = vmul.f32 %v1402, %v1411
      %v1414 = vmul.f32 %v1404, %v1412
      %v1415 = vpack.c.bf16 %v1414, %v1413
      %1417 = vrot.lane.b32.xlu0 %v1288, 112
      %v1418 = vpop.permute.xlu0 %1417
      %v1420 = vsel %vm1263, %v1415, 0
      %v1423 = vand.u32 %v1418, %v1295
      %1425 = vmatprep.subr.bf16.mxu0 0
      %1426 = vmatpush1.bf16.msra.mxu0 %v1423
      %1427 = vmatprep.subr.bf16.mxu0 0
      %1428 = vmatpush1.bf16.msra.mxu0 0
      %1429 = vmatprep.subr.bf16.mxu0 0
      %1430 = vmatpush1.bf16.msra.mxu0 0
      %1431 = vmatprep.subr.bf16.mxu0 0
      %1432 = vmatpush1.bf16.msra.mxu0 0
      %1433 = vmatprep.subr.bf16.mxu0 0
      %1434 = vmatpush1.bf16.msra.mxu0 0
      %1435 = vmatprep.subr.bf16.mxu0 0
      %1436 = vmatpush1.bf16.msra.mxu0 0
      %1437 = vmatprep.subr.bf16.mxu0 0
      %1438 = vmatpush1.bf16.msra.mxu0 0
      %1439 = vmatprep.subr.bf16.mxu0 0
      %1440 = vmatpush1.bf16.msra.mxu0 0
      %1441 = vmatprep.subr.bf16.mxu0 0
      %1442 = vmatpush1.bf16.msra.mxu0 0
      %1443 = vmatprep.subr.bf16.mxu0 0
      %1444 = vmatpush1.bf16.msra.mxu0 0
      %1445 = vmatprep.subr.bf16.mxu0 0
      %1446 = vmatpush1.bf16.msra.mxu0 0
      %1447 = vmatprep.subr.bf16.mxu0 0
      %1448 = vmatpush1.bf16.msra.mxu0 0
      %1449 = vmatprep.subr.bf16.mxu0 0
      %1450 = vmatpush1.bf16.msra.mxu0 0
      %1451 = vmatprep.subr.bf16.mxu0 0
      %1452 = vmatpush1.bf16.msra.mxu0 0
      %1453 = vmatprep.subr.bf16.mxu0 0
      %1454 = vmatpush1.bf16.msra.mxu0 0
      %1455 = vmatprep.subr.bf16.mxu0 0
      %1456 = vmatpush1.bf16.msra.mxu0 0
      %1457 = vmatprep.mubr.bf16.mxu0 0
      %1458 = vmatmul.mubr.bf16.gmra.mrb[0].mxu0 %v1420
      %v1459 = vpop.f32.mrb[0].mxu0
      %v1460 = vadd.f32 0.0, %v1459
      %v1461 = vpop.f32.mrb[0].mxu0
      %v1462 = vpop.f32.mrb[0].mxu0
      %v1463 = vadd.f32 0.0, %v1462
      %v1464 = vpop.f32.mrb[0].mxu0
      %1465 = vdwg.mxu0
      %1466 = vrot.lane.b32.xlu0 %v1210, 96
      %v1467 = vpop.permute.xlu0 %1466
      %1468 = vrot.lane.b32.xlu0 %v1210, 32
      %v1469 = vpop.permute.xlu0 %1468
      %v1471 = vsel %vm220, %v1467, 0
      %v1474 = vsel %vm220, %v1469, 0
      %1476 = vmatprep.subr.bf16.mxu0 0
      %1477 = vmatpush1.bf16.xpose.msra.mxu0 %v1474
      %1478 = vmatprep.subr.bf16.mxu0 0
      %1479 = vmatpush1.bf16.xpose.msra.mxu0 0
      %1480 = vmatprep.subr.bf16.mxu0 0
      %1481 = vmatpush1.bf16.xpose.msra.mxu0 0
      %1482 = vmatprep.subr.bf16.mxu0 0
      %1483 = vmatpush1.bf16.xpose.msra.mxu0 0
      %1484 = vmatprep.subr.bf16.mxu0 0
      %1485 = vmatpush1.bf16.xpose.msra.mxu0 0
      %1486 = vmatprep.subr.bf16.mxu0 0
      %1487 = vmatpush1.bf16.xpose.msra.mxu0 0
      %1488 = vmatprep.subr.bf16.mxu0 0
      %1489 = vmatpush1.bf16.xpose.msra.mxu0 0
      %1490 = vmatprep.subr.bf16.mxu0 0
      %1491 = vmatpush1.bf16.xpose.msra.mxu0 0
      %1492 = vmatprep.subr.bf16.mxu0 0
      %1493 = vmatpush1.bf16.xpose.msra.mxu0 0
      %1494 = vmatprep.subr.bf16.mxu0 0
      %1495 = vmatpush1.bf16.xpose.msra.mxu0 0
      %1496 = vmatprep.subr.bf16.mxu0 0
      %1497 = vmatpush1.bf16.xpose.msra.mxu0 0
      %1498 = vmatprep.subr.bf16.mxu0 0
      %1499 = vmatpush1.bf16.xpose.msra.mxu0 0
      %1500 = vmatprep.subr.bf16.mxu0 0
      %1501 = vmatpush1.bf16.xpose.msra.mxu0 0
      %1502 = vmatprep.subr.bf16.mxu0 0
      %1503 = vmatpush1.bf16.xpose.msra.mxu0 0
      %1504 = vmatprep.subr.bf16.mxu0 0
      %1505 = vmatpush1.bf16.xpose.msra.mxu0 0
      %1506 = vmatprep.subr.bf16.mxu0 0
      %1507 = vmatpush1.bf16.xpose.msra.mxu0 0
      %1508 = vmatprep.mubr.bf16.mxu0 0
      %1509 = vmatmul.mubr.bf16.gmra.mrb[0].mxu0 %v1471
      %v1510 = vpop.f32.mrb[0].mxu0
      %v1511 = vadd.f32 0.0, %v1510
      %v1512 = vpop.f32.mrb[0].mxu0
      %v1513 = vpop.f32.mrb[0].mxu0
      %v1514 = vadd.f32 0.0, %v1513
      %v1515 = vpop.f32.mrb[0].mxu0
      %1516 = vdwg.mxu0
      %v1517 = vmul.f32 %v1511, 0.25
      %v1518 = vmul.f32 %v1514, 0.25
      %v1519 = vsel %vm1263, %v1517, -inf
      %1520 = vmax.xlane.f32.xlu0 %v1519
      %v1521 = vpop.xlane.xlu0 %1520
      %v1522 = vsel %vm1267, %v1518, -inf
      %1523 = vmax.xlane.f32.xlu0 %v1522
      %v1524 = vpop.xlane.xlu0 %1523
      %v1525 = vsub.f32 %v1517, %v1521
      %v1526 = vsub.f32 %v1518, %v1524
      %v1527 = vmul.f32 %v1525, 1.442695
      %v1528 = vpow.pop %v1527
      %v1529 = vmul.f32 %v1526, 1.442695
      %v1530 = vpow.pop %v1529
      %v1531 = vsel %vm1263, %v1528, 0.0
      %1532 = vadd.xlane.f32.xlu0 %v1531
      %v1533 = vpop.xlane.xlu0 %1532
      %v1534 = vsel %vm1267, %v1530, 0.0
      %1535 = vadd.xlane.f32.xlu0 %v1534
      %v1536 = vpop.xlane.xlu0 %1535
      %v1537 = vrcp.pop %v1533
      %v1538 = vrcp.pop %v1536
      %v1539 = vmul.f32 %v1528, %v1537
      %v1540 = vmul.f32 %v1530, %v1538
      %v1541 = vpack.c.bf16 %v1540, %v1539
      %1542 = vrot.lane.b32.xlu0 %v1288, 96
      %v1543 = vpop.permute.xlu0 %1542
      %v1545 = vsel %vm1263, %v1541, 0
      %v1548 = vand.u32 %v1543, %v1295
      %1550 = vmatprep.subr.bf16.mxu0 0
      %1551 = vmatpush1.bf16.msra.mxu0 %v1548
      %1552 = vmatprep.subr.bf16.mxu0 0
      %1553 = vmatpush1.bf16.msra.mxu0 0
      %1554 = vmatprep.subr.bf16.mxu0 0
      %1555 = vmatpush1.bf16.msra.mxu0 0
      %1556 = vmatprep.subr.bf16.mxu0 0
      %1557 = vmatpush1.bf16.msra.mxu0 0
      %1558 = vmatprep.subr.bf16.mxu0 0
      %1559 = vmatpush1.bf16.msra.mxu0 0
      %1560 = vmatprep.subr.bf16.mxu0 0
      %1561 = vmatpush1.bf16.msra.mxu0 0
      %1562 = vmatprep.subr.bf16.mxu0 0
      %1563 = vmatpush1.bf16.msra.mxu0 0
      %1564 = vmatprep.subr.bf16.mxu0 0
      %1565 = vmatpush1.bf16.msra.mxu0 0
      %1566 = vmatprep.subr.bf16.mxu0 0
      %1567 = vmatpush1.bf16.msra.mxu0 0
      %1568 = vmatprep.subr.bf16.mxu0 0
      %1569 = vmatpush1.bf16.msra.mxu0 0
      %1570 = vmatprep.subr.bf16.mxu0 0
      %1571 = vmatpush1.bf16.msra.mxu0 0
      %1572 = vmatprep.subr.bf16.mxu0 0
      %1573 = vmatpush1.bf16.msra.mxu0 0
      %1574 = vmatprep.subr.bf16.mxu0 0
      %1575 = vmatpush1.bf16.msra.mxu0 0
      %1576 = vmatprep.subr.bf16.mxu0 0
      %1577 = vmatpush1.bf16.msra.mxu0 0
      %1578 = vmatprep.subr.bf16.mxu0 0
      %1579 = vmatpush1.bf16.msra.mxu0 0
      %1580 = vmatprep.subr.bf16.mxu0 0
      %1581 = vmatpush1.bf16.msra.mxu0 0
      %1582 = vmatprep.mubr.bf16.mxu0 0
      %1583 = vmatmul.mubr.bf16.gmra.mrb[0].mxu0 %v1545
      %v1584 = vpop.f32.mrb[0].mxu0
      %v1585 = vadd.f32 0.0, %v1584
      %v1586 = vpop.f32.mrb[0].mxu0
      %v1587 = vpop.f32.mrb[0].mxu0
      %v1588 = vadd.f32 0.0, %v1587
      %v1589 = vpop.f32.mrb[0].mxu0
      %1590 = vdwg.mxu0
      %1591 = vrot.lane.b32.xlu0 %v1210, 80
      %v1592 = vpop.permute.xlu0 %1591
      %1593 = vrot.lane.b32.xlu0 %v1210, 16
      %v1594 = vpop.permute.xlu0 %1593
      %v1596 = vsel %vm220, %v1592, 0
      %v1599 = vsel %vm220, %v1594, 0
      %1601 = vmatprep.subr.bf16.mxu0 0
      %1602 = vmatpush1.bf16.xpose.msra.mxu0 %v1599
      %1603 = vmatprep.subr.bf16.mxu0 0
      %1604 = vmatpush1.bf16.xpose.msra.mxu0 0
      %1605 = vmatprep.subr.bf16.mxu0 0
      %1606 = vmatpush1.bf16.xpose.msra.mxu0 0
      %1607 = vmatprep.subr.bf16.mxu0 0
      %1608 = vmatpush1.bf16.xpose.msra.mxu0 0
      %1609 = vmatprep.subr.bf16.mxu0 0
      %1610 = vmatpush1.bf16.xpose.msra.mxu0 0
      %1611 = vmatprep.subr.bf16.mxu0 0
      %1612 = vmatpush1.bf16.xpose.msra.mxu0 0
      %1613 = vmatprep.subr.bf16.mxu0 0
      %1614 = vmatpush1.bf16.xpose.msra.mxu0 0
      %1615 = vmatprep.subr.bf16.mxu0 0
      %1616 = vmatpush1.bf16.xpose.msra.mxu0 0
      %1617 = vmatprep.subr.bf16.mxu0 0
      %1618 = vmatpush1.bf16.xpose.msra.mxu0 0
      %1619 = vmatprep.subr.bf16.mxu0 0
      %1620 = vmatpush1.bf16.xpose.msra.mxu0 0
      %1621 = vmatprep.subr.bf16.mxu0 0
      %1622 = vmatpush1.bf16.xpose.msra.mxu0 0
      %1623 = vmatprep.subr.bf16.mxu0 0
      %1624 = vmatpush1.bf16.xpose.msra.mxu0 0
      %1625 = vmatprep.subr.bf16.mxu0 0
      %1626 = vmatpush1.bf16.xpose.msra.mxu0 0
      %1627 = vmatprep.subr.bf16.mxu0 0
      %1628 = vmatpush1.bf16.xpose.msra.mxu0 0
      %1629 = vmatprep.subr.bf16.mxu0 0
      %1630 = vmatpush1.bf16.xpose.msra.mxu0 0
      %1631 = vmatprep.subr.bf16.mxu0 0
      %1632 = vmatpush1.bf16.xpose.msra.mxu0 0
      %1633 = vmatprep.mubr.bf16.mxu0 0
      %1634 = vmatmul.mubr.bf16.gmra.mrb[0].mxu0 %v1596
      %v1635 = vpop.f32.mrb[0].mxu0
      %v1636 = vadd.f32 0.0, %v1635
      %v1637 = vpop.f32.mrb[0].mxu0
      %v1638 = vpop.f32.mrb[0].mxu0
      %v1639 = vadd.f32 0.0, %v1638
      %v1640 = vpop.f32.mrb[0].mxu0
      %1641 = vdwg.mxu0
      %v1642 = vmul.f32 %v1636, 0.25
      %v1643 = vmul.f32 %v1639, 0.25
      %v1644 = vsel %vm1263, %v1642, -inf
      %1645 = vmax.xlane.f32.xlu0 %v1644
      %v1646 = vpop.xlane.xlu0 %1645
      %v1647 = vsel %vm1267, %v1643, -inf
      %1648 = vmax.xlane.f32.xlu0 %v1647
      %v1649 = vpop.xlane.xlu0 %1648
      %v1650 = vsub.f32 %v1642, %v1646
      %v1651 = vsub.f32 %v1643, %v1649
      %v1652 = vmul.f32 %v1650, 1.442695
      %v1653 = vpow.pop %v1652
      %v1654 = vmul.f32 %v1651, 1.442695
      %v1655 = vpow.pop %v1654
      %v1656 = vsel %vm1263, %v1653, 0.0
      %1657 = vadd.xlane.f32.xlu0 %v1656
      %v1658 = vpop.xlane.xlu0 %1657
      %v1659 = vsel %vm1267, %v1655, 0.0
      %1660 = vadd.xlane.f32.xlu0 %v1659
      %v1661 = vpop.xlane.xlu0 %1660
      %v1662 = vrcp.pop %v1658
      %v1663 = vrcp.pop %v1661
      %v1664 = vmul.f32 %v1653, %v1662
      %v1665 = vmul.f32 %v1655, %v1663
      %v1666 = vpack.c.bf16 %v1665, %v1664
      %1667 = vrot.lane.b32.xlu0 %v1288, 80
      %v1668 = vpop.permute.xlu0 %1667
      %v1670 = vsel %vm1263, %v1666, 0
      %v1673 = vand.u32 %v1668, %v1295
      %1675 = vmatprep.subr.bf16.mxu0 0
      %1676 = vmatpush1.bf16.msra.mxu0 %v1673
      %1677 = vmatprep.subr.bf16.mxu0 0
      %1678 = vmatpush1.bf16.msra.mxu0 0
      %1679 = vmatprep.subr.bf16.mxu0 0
      %1680 = vmatpush1.bf16.msra.mxu0 0
      %1681 = vmatprep.subr.bf16.mxu0 0
      %1682 = vmatpush1.bf16.msra.mxu0 0
      %1683 = vmatprep.subr.bf16.mxu0 0
      %1684 = vmatpush1.bf16.msra.mxu0 0
      %1685 = vmatprep.subr.bf16.mxu0 0
      %1686 = vmatpush1.bf16.msra.mxu0 0
      %1687 = vmatprep.subr.bf16.mxu0 0
      %1688 = vmatpush1.bf16.msra.mxu0 0
      %1689 = vmatprep.subr.bf16.mxu0 0
      %1690 = vmatpush1.bf16.msra.mxu0 0
      %1691 = vmatprep.subr.bf16.mxu0 0
      %1692 = vmatpush1.bf16.msra.mxu0 0
      %1693 = vmatprep.subr.bf16.mxu0 0
      %1694 = vmatpush1.bf16.msra.mxu0 0
      %1695 = vmatprep.subr.bf16.mxu0 0
      %1696 = vmatpush1.bf16.msra.mxu0 0
      %1697 = vmatprep.subr.bf16.mxu0 0
      %1698 = vmatpush1.bf16.msra.mxu0 0
      %1699 = vmatprep.subr.bf16.mxu0 0
      %1700 = vmatpush1.bf16.msra.mxu0 0
      %1701 = vmatprep.subr.bf16.mxu0 0
      %1702 = vmatpush1.bf16.msra.mxu0 0
      %1703 = vmatprep.subr.bf16.mxu0 0
      %1704 = vmatpush1.bf16.msra.mxu0 0
      %1705 = vmatprep.subr.bf16.mxu0 0
      %1706 = vmatpush1.bf16.msra.mxu0 0
      %1707 = vmatprep.mubr.bf16.mxu0 0
      %1708 = vmatmul.mubr.bf16.gmra.mrb[0].mxu0 %v1670
      %v1709 = vpop.f32.mrb[0].mxu0
      %v1710 = vadd.f32 0.0, %v1709
      %v1711 = vpop.f32.mrb[0].mxu0
      %v1712 = vpop.f32.mrb[0].mxu0
      %v1713 = vadd.f32 0.0, %v1712
      %v1714 = vpop.f32.mrb[0].mxu0
      %1715 = vdwg.mxu0
      %1718 = vrot.lane.b32.xlu0 %v1460, 16
      %v1719 = vpop.permute.xlu0 %1718
      %1720 = vrot.lane.b32.xlu0 %v1463, 16
      %v1721 = vpop.permute.xlu0 %1720
      %1726 = vrot.lane.b32.xlu0 %v1585, 32
      %v1727 = vpop.permute.xlu0 %1726
      %1728 = vrot.lane.b32.xlu0 %v1588, 32
      %v1729 = vpop.permute.xlu0 %1728
      %1734 = vrot.lane.b32.xlu0 %v1710, 48
      %v1735 = vpop.permute.xlu0 %1734
      %1736 = vrot.lane.b32.xlu0 %v1713, 48
      %v1737 = vpop.permute.xlu0 %1736
      %v1740 = vsel %vm220, %v1334, %v1719
      %v1741 = vsel %vm220, %v1337, %v1721
      %vm1742 = vcmask 261120
      %v1743 = vsel %vm1742, %v1740, %v1727
      %v1744 = vsel %vm1742, %v1741, %v1729
      %vm1745 = vcmask 392192
      %v1746 = vsel %vm1745, %v1743, %v1735
      %v1747 = vsel %vm1745, %v1744, %v1737
      %v1748 = vld [vmem:[%s1 + $0xc8] sm:$0xf]
      %v1749 = vld [vmem:[%s1 + $0xcc] sm:$0xf]
      %v1750 = vld [vmem:[%s1 + $0xd0] sm:$0xf]
      %v1751 = vld [vmem:[%s1 + $0xd4] sm:$0xf]
      %v1752 = vld [vmem:[%s1 + $0xd8] sm:$0xf]
      %v1753 = vld [vmem:[%s1 + $0xdc] sm:$0xf]
      %v1754 = vld [vmem:[%s1 + $0xe0] sm:$0xf]
      %v1755 = vld [vmem:[%s1 + $0xe4] sm:$0xf]
      %v1756 = vpack.c.bf16 %v1747, %v1746
      %v1757 = vld [vmem:[%s3 + $0x11] ss:$0 sm:$0xff]
      %v1766 = vunpack.c.l.b16 %v1748
      %v1767 = vunpack.c.l.b16 %v1749
      %v1768 = vunpack.c.l.b16 %v1750
      %v1769 = vunpack.c.l.b16 %v1751
      %v1770 = vunpack.c.l.b16 %v1752
      %v1771 = vunpack.c.l.b16 %v1753
      %v1772 = vunpack.c.l.b16 %v1754
      %v1773 = vunpack.c.l.b16 %v1755
      %v1774 = vpack.c.b16 %v1767, %v1766
      %v1775 = vpack.c.b16 %v1769, %v1768
      %v1776 = vpack.c.b16 %v1771, %v1770
      %v1777 = vpack.c.b16 %v1773, %v1772
      %v1783 = vsel %vm421, %v1756, 0
      %1785 = vmatprep.subr.bf16.mxu0 0
      %1786 = vmatpush1.bf16.msra.mxu0 %v1774
      %1787 = vmatprep.subr.bf16.mxu0 0
      %1788 = vmatpush1.bf16.msra.mxu0 %v1775
      %1789 = vmatprep.subr.bf16.mxu0 0
      %1790 = vmatpush1.bf16.msra.mxu0 %v1776
      %1791 = vmatprep.subr.bf16.mxu0 0
      %1792 = vmatpush1.bf16.msra.mxu0 %v1777
      %1793 = vmatprep.subr.bf16.mxu0 0
      %1794 = vmatpush1.bf16.msra.mxu0 0
      %1795 = vmatprep.subr.bf16.mxu0 0
      %1796 = vmatpush1.bf16.msra.mxu0 0
      %1797 = vmatprep.subr.bf16.mxu0 0
      %1798 = vmatpush1.bf16.msra.mxu0 0
      %1799 = vmatprep.subr.bf16.mxu0 0
      %1800 = vmatpush1.bf16.msra.mxu0 0
      %1801 = vmatprep.subr.bf16.mxu0 0
      %1802 = vmatpush1.bf16.msra.mxu0 0
      %1803 = vmatprep.subr.bf16.mxu0 0
      %1804 = vmatpush1.bf16.msra.mxu0 0
      %1805 = vmatprep.subr.bf16.mxu0 0
      %1806 = vmatpush1.bf16.msra.mxu0 0
      %1807 = vmatprep.subr.bf16.mxu0 0
      %1808 = vmatpush1.bf16.msra.mxu0 0
      %1809 = vmatprep.subr.bf16.mxu0 0
      %1810 = vmatpush1.bf16.msra.mxu0 0
      %1811 = vmatprep.subr.bf16.mxu0 0
      %1812 = vmatpush1.bf16.msra.mxu0 0
      %1813 = vmatprep.subr.bf16.mxu0 0
      %1814 = vmatpush1.bf16.msra.mxu0 0
      %1815 = vmatprep.subr.bf16.mxu0 0
      %1816 = vmatpush1.bf16.msra.mxu0 0
      %1817 = vmatprep.mubr.bf16.mxu0 0
      %1818 = vmatmul.mubr.bf16.gmra.mrb[0].mxu0 %v1783
      %v1819 = vpop.f32.mrb[0].mxu0
      %v1820 = vadd.f32 %v1757, %v1819
      %v1821 = vpop.f32.mrb[0].mxu0
      %v1822 = vpop.f32.mrb[0].mxu0
      %v1823 = vadd.f32 %v1757, %v1822
      %v1824 = vpop.f32.mrb[0].mxu0
      %1825 = vdwg.mxu0
      %v1826 = vadd.f32 %v1100, %v1820
      %v1827 = vadd.f32 %v1101, %v1823
      %v1828 = vsel %vm421, %v1826, 0.0
      %1829 = vadd.xlane.f32.xlu0 %v1828
      %v1830 = vpop.xlane.xlu0 %1829
      %v1831 = vsel %vm961, %v1827, 0.0
      %1832 = vadd.xlane.f32.xlu0 %v1831
      %v1833 = vpop.xlane.xlu0 %1832
      %v1834 = vmul.f32 %v1830, %v965
      %v1835 = vmul.f32 %v1833, %v965
      %v1836 = vsub.f32 %v1826, %v1834
      %v1837 = vsub.f32 %v1827, %v1835
      %v1838 = vmul.f32 %v1836, %v1836
      %v1839 = vmul.f32 %v1837, %v1837
      %v1840 = vsel %vm421, %v1838, 0.0
      %1841 = vadd.xlane.f32.xlu0 %v1840
      %v1842 = vpop.xlane.xlu0 %1841
      %v1843 = vsel %vm961, %v1839, 0.0
      %1844 = vadd.xlane.f32.xlu0 %v1843
      %v1845 = vpop.xlane.xlu0 %1844
      %v1846 = vmul.f32 %v1842, %v965
      %v1847 = vmul.f32 %v1845, %v965
      %v1848 = vadd.f32 %v1846, 1e-05
      %v1849 = vadd.f32 %v1847, 1e-05
      %v1850 = vrsqrt.pop %v1848
      %v1851 = vrsqrt.pop %v1849
      %v1852 = vmul.f32 %v1836, %v1850
      %v1853 = vmul.f32 %v1837, %v1851
      %v1854 = vld [vmem:[%s3 + $0x12] ss:$0 sm:$0xff]
      %v1855 = vmul.f32 %v1852, %v1854
      %v1856 = vmul.f32 %v1853, %v1854
      %v1857 = vld [vmem:[%s3 + $0x13] ss:$0 sm:$0xff]
      %v1858 = vadd.f32 %v1855, %v1857
      %v1859 = vadd.f32 %v1856, %v1857
      %v1860 = vld [vmem:[%s2 + $0x8] sm:$0xf]
      %v1861 = vld [vmem:[%s2 + $0x14] sm:$0xf]
      %v1862 = vld [vmem:[%s2 + $0x20] sm:$0xf]
      %v1863 = vld [vmem:[%s2 + $0x2c] sm:$0xf]
      %v1864 = vld [vmem:[%s2 + $0x38] sm:$0xf]
      %v1865 = vld [vmem:[%s2 + $0x44] sm:$0xf]
      %v1866 = vld [vmem:[%s2 + $0x50] sm:$0xf]
      %v1867 = vld [vmem:[%s2 + $0x5c] sm:$0xf]
      %v1868 = vpack.c.bf16 %v1859, %v1858
      %v1869 = vld [vmem:[%s3 + $0x14] ss:$0 sm:$0xff]
      %v1878 = vunpack.c.l.b16 %v1860
      %v1879 = vunpack.c.l.b16 %v1861
      %v1880 = vunpack.c.l.b16 %v1862
      %v1881 = vunpack.c.l.b16 %v1863
      %v1882 = vunpack.c.l.b16 %v1864
      %v1883 = vunpack.c.l.b16 %v1865
      %v1884 = vunpack.c.l.b16 %v1866
      %v1885 = vunpack.c.l.b16 %v1867
      %v1886 = vpack.c.b16 %v1879, %v1878
      %v1887 = vpack.c.b16 %v1881, %v1880
      %v1888 = vpack.c.b16 %v1883, %v1882
      %v1889 = vpack.c.b16 %v1885, %v1884
      %v1895 = vsel %vm421, %v1868, 0
      %1897 = vmatprep.subr.bf16.mxu0 0
      %1898 = vmatpush1.bf16.msra.mxu0 %v1886
      %1899 = vmatprep.subr.bf16.mxu0 0
      %1900 = vmatpush1.bf16.msra.mxu0 %v1887
      %1901 = vmatprep.subr.bf16.mxu0 0
      %1902 = vmatpush1.bf16.msra.mxu0 %v1888
      %1903 = vmatprep.subr.bf16.mxu0 0
      %1904 = vmatpush1.bf16.msra.mxu0 %v1889
      %1905 = vmatprep.subr.bf16.mxu0 0
      %1906 = vmatpush1.bf16.msra.mxu0 0
      %1907 = vmatprep.subr.bf16.mxu0 0
      %1908 = vmatpush1.bf16.msra.mxu0 0
      %1909 = vmatprep.subr.bf16.mxu0 0
      %1910 = vmatpush1.bf16.msra.mxu0 0
      %1911 = vmatprep.subr.bf16.mxu0 0
      %1912 = vmatpush1.bf16.msra.mxu0 0
      %1913 = vmatprep.subr.bf16.mxu0 0
      %1914 = vmatpush1.bf16.msra.mxu0 0
      %1915 = vmatprep.subr.bf16.mxu0 0
      %1916 = vmatpush1.bf16.msra.mxu0 0
      %1917 = vmatprep.subr.bf16.mxu0 0
      %1918 = vmatpush1.bf16.msra.mxu0 0
      %1919 = vmatprep.subr.bf16.mxu0 0
      %1920 = vmatpush1.bf16.msra.mxu0 0
      %1921 = vmatprep.subr.bf16.mxu0 0
      %1922 = vmatpush1.bf16.msra.mxu0 0
      %1923 = vmatprep.subr.bf16.mxu0 0
      %1924 = vmatpush1.bf16.msra.mxu0 0
      %1925 = vmatprep.subr.bf16.mxu0 0
      %1926 = vmatpush1.bf16.msra.mxu0 0
      %1927 = vmatprep.subr.bf16.mxu0 0
      %1928 = vmatpush1.bf16.msra.mxu0 0
      %1929 = vmatprep.mubr.bf16.mxu0 0
      %1930 = vmatmul.mubr.bf16.gmra.mrb[0].mxu0 %v1895
      %v1931 = vpop.f32.mrb[0].mxu0
      %v1932 = vadd.f32 %v1869, %v1931
      %v1933 = vpop.f32.mrb[0].mxu0
      %v1934 = vpop.f32.mrb[0].mxu0
      %v1935 = vadd.f32 %v1869, %v1934
      %v1936 = vpop.f32.mrb[0].mxu0
      %1937 = vdwg.mxu0
      %v1938 = vmul.f32 %v1932, 0.5
      %v1939 = vmul.f32 %v1935, 0.5
      %v1940 = vmul.f32 %v1932, 0.044715
      %v1941 = vmul.f32 %v1935, 0.044715
      %v1942 = vmul.f32 %v1940, %v1932
      %v1943 = vmul.f32 %v1941, %v1935
      %v1944 = vmul.f32 %v1942, %v1932
      %v1945 = vmul.f32 %v1943, %v1935
      %v1946 = vadd.f32 %v1932, %v1944
      %v1947 = vadd.f32 %v1935, %v1945
      %v1948 = vmul.f32 %v1946, 0.7978846
      %v1949 = vmul.f32 %v1947, 0.7978846
      %v1950 = vtanh.pop %v1948
      %v1951 = vtanh.pop %v1949
      %v1952 = vadd.f32 %v1950, 1.0
      %v1953 = vadd.f32 %v1951, 1.0
      %v1954 = vmul.f32 %v1938, %v1952
      %v1955 = vmul.f32 %v1939, %v1953
      %v1956 = vld [vmem:[%s1 + $0xe8] sm:$0xf]
      %v1957 = vld [vmem:[%s1 + $0xec] sm:$0xf]
      %v1958 = vld [vmem:[%s1 + $0xf0] sm:$0xf]
      %v1959 = vld [vmem:[%s1 + $0xf4] sm:$0xf]
      %v1960 = vld [vmem:[%s1 + $0xf8] sm:$0xf]
      %v1961 = vld [vmem:[%s1 + $0xfc] sm:$0xf]
      %v1962 = vld [vmem:[%s1 + $0x100] sm:$0xf]
      %v1963 = vld [vmem:[%s1 + $0x104] sm:$0xf]
      %v1964 = vld [vmem:[%s1 + $0x108] sm:$0xf]
      %v1965 = vld [vmem:[%s1 + $0x10c] sm:$0xf]
      %v1966 = vld [vmem:[%s1 + $0x110] sm:$0xf]
      %v1967 = vld [vmem:[%s1 + $0x114] sm:$0xf]
      %v1968 = vld [vmem:[%s1 + $0x118] sm:$0xf]
      %v1969 = vld [vmem:[%s1 + $0x11c] sm:$0xf]
      %v1970 = vld [vmem:[%s1 + $0x120] sm:$0xf]
      %v1971 = vld [vmem:[%s1 + $0x124] sm:$0xf]
      %v1972 = vpack.c.bf16 %v1955, %v1954
      %v1973 = vld [vmem:[%s3 + $0x15] ss:$0 sm:$0xff]
      %v1990 = vunpack.c.l.b16 %v1956
      %v1991 = vunpack.c.l.b16 %v1957
      %v1992 = vunpack.c.l.b16 %v1958
      %v1993 = vunpack.c.l.b16 %v1959
      %v1994 = vunpack.c.l.b16 %v1960
      %v1995 = vunpack.c.l.b16 %v1961
      %v1996 = vunpack.c.l.b16 %v1962
      %v1997 = vunpack.c.l.b16 %v1963
      %v1998 = vunpack.c.l.b16 %v1964
      %v1999 = vunpack.c.l.b16 %v1965
      %v2000 = vunpack.c.l.b16 %v1966
      %v2001 = vunpack.c.l.b16 %v1967
      %v2002 = vunpack.c.l.b16 %v1968
      %v2003 = vunpack.c.l.b16 %v1969
      %v2004 = vunpack.c.l.b16 %v1970
      %v2005 = vunpack.c.l.b16 %v1971
      %v2006 = vpack.c.b16 %v1991, %v1990
      %v2007 = vpack.c.b16 %v1993, %v1992
      %v2008 = vpack.c.b16 %v1995, %v1994
      %v2009 = vpack.c.b16 %v1997, %v1996
      %v2010 = vpack.c.b16 %v1999, %v1998
      %v2011 = vpack.c.b16 %v2001, %v2000
      %v2012 = vpack.c.b16 %v2003, %v2002
      %v2013 = vpack.c.b16 %v2005, %v2004
      %2022 = vmatprep.subr.bf16.mxu0 0
      %2023 = vmatpush1.bf16.msra.mxu0 %v2006
      %2024 = vmatprep.subr.bf16.mxu0 0
      %2025 = vmatpush1.bf16.msra.mxu0 %v2007
      %2026 = vmatprep.subr.bf16.mxu0 0
      %2027 = vmatpush1.bf16.msra.mxu0 %v2008
      %2028 = vmatprep.subr.bf16.mxu0 0
      %2029 = vmatpush1.bf16.msra.mxu0 %v2009
      %2030 = vmatprep.subr.bf16.mxu0 0
      %2031 = vmatpush1.bf16.msra.mxu0 %v2010
      %2032 = vmatprep.subr.bf16.mxu0 0
      %2033 = vmatpush1.bf16.msra.mxu0 %v2011
      %2034 = vmatprep.subr.bf16.mxu0 0
      %2035 = vmatpush1.bf16.msra.mxu0 %v2012
      %2036 = vmatprep.subr.bf16.mxu0 0
      %2037 = vmatpush1.bf16.msra.mxu0 %v2013
      %2038 = vmatprep.subr.bf16.mxu0 0
      %2039 = vmatpush1.bf16.msra.mxu0 0
      %2040 = vmatprep.subr.bf16.mxu0 0
      %2041 = vmatpush1.bf16.msra.mxu0 0
      %2042 = vmatprep.subr.bf16.mxu0 0
      %2043 = vmatpush1.bf16.msra.mxu0 0
      %2044 = vmatprep.subr.bf16.mxu0 0
      %2045 = vmatpush1.bf16.msra.mxu0 0
      %2046 = vmatprep.subr.bf16.mxu0 0
      %2047 = vmatpush1.bf16.msra.mxu0 0
      %2048 = vmatprep.subr.bf16.mxu0 0
      %2049 = vmatpush1.bf16.msra.mxu0 0
      %2050 = vmatprep.subr.bf16.mxu0 0
      %2051 = vmatpush1.bf16.msra.mxu0 0
      %2052 = vmatprep.subr.bf16.mxu0 0
      %2053 = vmatpush1.bf16.msra.mxu0 0
      %2054 = vmatprep.mubr.bf16.mxu0 0
      %2055 = vmatmul.mubr.bf16.gmra.mrb[0].mxu0 %v1972
      %v2056 = vpop.f32.mrb[0].mxu0
      %v2057 = vadd.f32 %v1973, %v2056
      %v2058 = vpop.f32.mrb[0].mxu0
      %v2059 = vpop.f32.mrb[0].mxu0
      %v2060 = vadd.f32 %v1973, %v2059
      %v2061 = vpop.f32.mrb[0].mxu0
      %2062 = vdwg.mxu0
      %v2063 = vadd.f32 %v1858, %v2057
      %v2064 = vadd.f32 %v1859, %v2060
      %v2065 = vsel %vm421, %v2063, 0.0
      %2066 = vadd.xlane.f32.xlu0 %v2065
      %v2067 = vpop.xlane.xlu0 %2066
      %v2068 = vsel %vm961, %v2064, 0.0
      %2069 = vadd.xlane.f32.xlu0 %v2068
      %v2070 = vpop.xlane.xlu0 %2069
      %v2071 = vmul.f32 %v2067, %v965
      %v2072 = vmul.f32 %v2070, %v965
      %v2073 = vsub.f32 %v2063, %v2071
      %v2074 = vsub.f32 %v2064, %v2072
      %v2075 = vmul.f32 %v2073, %v2073
      %v2076 = vmul.f32 %v2074, %v2074
      %v2077 = vsel %vm421, %v2075, 0.0
      %2078 = vadd.xlane.f32.xlu0 %v2077
      %v2079 = vpop.xlane.xlu0 %2078
      %v2080 = vsel %vm961, %v2076, 0.0
      %2081 = vadd.xlane.f32.xlu0 %v2080
      %v2082 = vpop.xlane.xlu0 %2081
      %v2083 = vmul.f32 %v2079, %v965
      %v2084 = vmul.f32 %v2082, %v965
      %v2085 = vadd.f32 %v2083, 1e-05
      %v2086 = vadd.f32 %v2084, 1e-05
      %v2087 = vrsqrt.pop %v2085
      %v2088 = vrsqrt.pop %v2086
      %v2089 = vmul.f32 %v2073, %v2087
      %v2090 = vmul.f32 %v2074, %v2088
      %v2091 = vld [vmem:[%s3 + $0x16] ss:$0 sm:$0xff]
      %v2092 = vmul.f32 %v2089, %v2091
      %v2093 = vmul.f32 %v2090, %v2091
      %v2094 = vld [vmem:[%s3 + $0x17] ss:$0 sm:$0xff]
      %v2095 = vadd.f32 %v2092, %v2094
      %v2096 = vadd.f32 %v2093, %v2094
      %2097 = vst.msk [vmem:[%s197] sm:$0xff] %vm421, %v2095
      %2098 = vst.msk [vmem:[%s197 + $0x8] sm:$0x7f] %vm961, %v2096
      %p2099 = scmp.lt.s32.totalorder %s15, 1
      %s2100 = scalar_select %p2099, %s15, 1
      %s2101 = smul.addr %s2100, 2
      %s2102 = smul.addr %s2101, 8
      %s2103 = scalar_lea.vmem %s4, %s2102
      // Predicated region
      $region37: #{ssl_forward.1} parent=35 // pred_check
        %p2104 = pneg %p122
      $region38: #{ssl_forward.1} parent=35 // pred_check_branch
        %2106 = sbr.rel (%p2104) target = $region40
      $region39: #{ssl_forward.1} parent=35 // pred_region
        _
      $region40: #{ssl_forward.1} parent=35 // pred_fallthru
        _
    $region36: #{ssl_forward.1} parent=5 // pred_fallthru
      _
    %p2107 = scmp.le.s32.totalorder 2, %s10
    // Predicated region
    $region41: #{ssl_forward.1} parent=5 // pred_check
      %p2108 = pneg %p2107
    $region42: #{ssl_forward.1} parent=5 // pred_check_branch
      %2110 = sbr.rel (%p2108) target = $region44
    $region43: #{ssl_forward.1} parent=5 // pred_region
      %s2111 = ssub.s32 %s10, 2
      // Predicated region
      $region45: #{ssl_forward.1} parent=43 // pred_check
        %p2112 = pneg %p128
      $region46: #{ssl_forward.1} parent=43 // pred_check_branch
        %2114 = sbr.rel (%p2112) target = $region48
      $region47: #{ssl_forward.1} parent=43 // pred_region
        %p2115 = scmp.lt.s32.totalorder %s16, 1
        %s2116 = scalar_select %p2115, %s16, 1
        %s2117 = smul.addr %s2116, 2
        %s2118 = smul.addr %s2117, 8
        %s2119 = scalar_lea.vmem %s4, %s2118
      $region48: #{ssl_forward.1} parent=43 // pred_fallthru
        _
    $region44: #{ssl_forward.1} parent=5 // pred_fallthru
      _
  $region6: #{ssl_forward.1} parent=0 // loop_footer
    %s14 = sadd.s32 1, %s10
  $region7: #{ssl_forward.1} parent=0 // loop_footer_branch
    %9 = sbr.rel target = $region3
  $region8: #{ssl_forward.1} parent=0 // loop_exit
    _

</llo_original>
